<compile_context>
chip_gen: v7x
topology: tpu7x:2x2x1
jax: 0.10.0
libtpu: 0.0.40
codegen_flags: <defaults>
</compile_context>

<pallas_src>
import math

import jax
import jax.numpy as jnp
from jax.experimental import pallas as pl
from jax.experimental.pallas import tpu as pltpu

_EPS = 1e-5            # torch.nn.LayerNorm default eps
_BF16 = jnp.bfloat16


def _layernorm(v, w, b):
    mu = jnp.mean(v, axis=-1, keepdims=True)
    var = jnp.mean((v - mu) ** 2, axis=-1, keepdims=True)
    return (v - mu) * jax.lax.rsqrt(var + _EPS) * w + b


def pab_kernel(x_ref, inw_ref, inb_ref,
               wkv_ref, bkv_ref, wqig_ref, bqig_ref,
               qnw_ref, qnb_ref, knw_ref, knb_ref,
               woa_ref, wom_ref, bo_ref,
               out_ref,
               y_s, k_s, v_s, q_s):
    S = x_ref.shape[1]
    E = x_ref.shape[2]
    H, D, _ = woa_ref.shape
    Mp = wom_ref.shape[0]
    TQ = out_ref.shape[1]
    qi = pl.program_id(1)

    # ---- once per batch element: LN(x), fused K/V projection, per-head K-norm ----
    @pl.when(qi == 0)
    def _():
        xf = x_ref[0]                                          # (S, E) f32
        y = _layernorm(xf, inw_ref[0], inb_ref[0])             # (S, E) f32
        y_s[...] = y.astype(_BF16)                             # reused by every q tile
        kv = jnp.dot(y.astype(_BF16), wkv_ref[...],
                     preferred_element_type=jnp.float32) + bkv_ref[0]   # (S, 2E) f32
        # TODO(synk): per-head LN below reduces over D (<128) lanes; a
        # block-diagonal-ones matmul reduction would keep lanes dense.
        for h in range(H):                                     # static loop, head-major scratch
            sl = slice(h * D, (h + 1) * D)
            kh = _layernorm(kv[:, sl], knw_ref[0], knb_ref[0])
            k_s[h] = kh.astype(_BF16)                          # (S, D)
            v_s[h] = kv[:, E + h * D:E + (h + 1) * D].astype(_BF16)

    # ---- per query tile ----
    row0 = pl.multiple_of(qi * TQ, TQ)
    y_q = y_s[pl.ds(row0, TQ), :]                              # (TQ, E) bf16
    # fused q / inner / gate projection: one lane-dense matmul, bf16 in, f32 acc
    qig = jnp.dot(y_q, wqig_ref[...],
                  preferred_element_type=jnp.float32) + bqig_ref[0]      # (TQ, E + 2*Mp)
    q_lin = qig[:, :E]
    inner = qig[:, E:E + Mp]
    gate = qig[:, E + Mp:]

    scale = 1.0 / math.sqrt(D)
    for h in range(H):                                         # static loop: per-head q-norm
        sl = slice(h * D, (h + 1) * D)
        qh = _layernorm(q_lin[:, sl], qnw_ref[0], qnb_ref[0]) * scale
        q_s[h] = qh.astype(_BF16)                              # (TQ, D)

    # head-batched attention on the MXU (bf16 inputs, f32 accumulation)
    s = jnp.einsum("hqd,hkd->hqk", q_s[...], k_s[...],
                   preferred_element_type=jnp.float32)          # (H, TQ, S) f32
    m = jnp.max(s, axis=-1, keepdims=True)
    p = jnp.exp(s - m)
    l = jnp.sum(p, axis=-1, keepdims=True)
    p = (p * pl.reciprocal(l, approx=True)).astype(_BF16)
    ctx = jnp.einsum("hqk,hkd->hqd", p, v_s[...],
                     preferred_element_type=jnp.float32)        # (H, TQ, D) f32

    # SwiGLU branch
    act = (inner * jax.nn.sigmoid(inner) * gate).astype(_BF16)  # (TQ, Mp)

    # fused out projection: concat([attn, act]) @ W_out folded into per-head
    # accumulation into a single f32 accumulator (no concatenate).
    out = jnp.dot(act, wom_ref[...], preferred_element_type=jnp.float32)
    for h in range(H):
        out = out + jnp.dot(ctx[h].astype(_BF16), woa_ref[h],
                            preferred_element_type=jnp.float32)
    out = out + bo_ref[0]

    # residual
    out_ref[0] = (x_ref[0, pl.ds(row0, TQ), :] + out).astype(out_ref.dtype)


def _round_up(x, m):
    return (x + m - 1) // m * m


def parallel_attention_block(x, params, num_heads, head_dim, mlp_hidden_dim):
    B, S, E = x.shape
    H, D, M = num_heads, head_dim, mlp_hidden_dim
    assert H * D == E
    f32 = jnp.float32
    Mp = _round_up(M, 128)          # lane-dense MLP hidden dim (zero padded -> exact)
    pad = Mp - M

    # ---- host-side weight prep: fuse, pad, cast to bf16 (f32 accumulation in-kernel) ----
    w_kv = jnp.concatenate([params["wk"], params["wv"]], axis=1).astype(_BF16)   # (E, 2E)
    b_kv = jnp.concatenate([params["bk"], params["bv"]], axis=1).astype(f32)     # (1, 2E)
    wm_p = jnp.pad(params["wm"], ((0, 0), (0, pad)))
    wg_p = jnp.pad(params["wg"], ((0, 0), (0, pad)))
    bm_p = jnp.pad(params["bm"], ((0, 0), (0, pad)))
    bg_p = jnp.pad(params["bg"], ((0, 0), (0, pad)))
    w_qig = jnp.concatenate([params["wq"], wm_p, wg_p], axis=1).astype(_BF16)    # (E, E+2Mp)
    b_qig = jnp.concatenate([params["bq"], bm_p, bg_p], axis=1).astype(f32)      # (1, E+2Mp)
    w_oa = params["wo_attn"].reshape(H, D, E).astype(_BF16)                      # (H, D, E)
    w_om = jnp.pad(params["wo_mlp"], ((0, pad), (0, 0))).astype(_BF16)           # (Mp, E)

    operands = [
        x,
        params["in_w"].astype(f32), params["in_b"].astype(f32),
        w_kv, b_kv, w_qig, b_qig,
        params["qn_w"].astype(f32), params["qn_b"].astype(f32),
        params["kn_w"].astype(f32), params["kn_b"].astype(f32),
        w_oa, w_om, params["bo"].astype(f32),
    ]

    # ---- query-tile size (second grid axis) ----
    if S % 256 == 0 and S > 256:
        TQ = 256
    elif S % 128 == 0 and S > 128:
        TQ = 128
    else:
        TQ = S      # TODO(synk): mask ragged sequence tails instead of full-S fallback
    n_q = S // TQ

    in_specs = [
        pl.BlockSpec((1, S, E), lambda b, q: (b, 0, 0)),        # x (full seq per batch elem)
        pl.BlockSpec((1, E), lambda b, q: (0, 0)),              # in_norm weight
        pl.BlockSpec((1, E), lambda b, q: (0, 0)),              # in_norm bias
        pl.BlockSpec((E, 2 * E), lambda b, q: (0, 0)),          # fused K/V weight (bf16)
        pl.BlockSpec((1, 2 * E), lambda b, q: (0, 0)),          # fused K/V bias
        pl.BlockSpec((E, E + 2 * Mp), lambda b, q: (0, 0)),     # fused Q/inner/gate weight
        pl.BlockSpec((1, E + 2 * Mp), lambda b, q: (0, 0)),     # fused Q/inner/gate bias
        pl.BlockSpec((1, D), lambda b, q: (0, 0)),              # q_norm weight
        pl.BlockSpec((1, D), lambda b, q: (0, 0)),              # q_norm bias
        pl.BlockSpec((1, D), lambda b, q: (0, 0)),              # k_norm weight
        pl.BlockSpec((1, D), lambda b, q: (0, 0)),              # k_norm bias
        pl.BlockSpec((H, D, E), lambda b, q: (0, 0, 0)),        # out proj (attn part, head-major)
        pl.BlockSpec((Mp, E), lambda b, q: (0, 0)),             # out proj (mlp part)
        pl.BlockSpec((1, E), lambda b, q: (0, 0)),              # out proj bias
    ]
    out_specs = pl.BlockSpec((1, TQ, E), lambda b, q: (b, q, 0))

    scratch_shapes = [
        pltpu.VMEM((S, E), _BF16),          # LN(x), reused by every query tile
        pltpu.VMEM((H, S, D), _BF16),       # per-head-normalized K
        pltpu.VMEM((H, S, D), _BF16),       # V
        pltpu.VMEM((H, TQ, D), _BF16),      # per-head-normalized, pre-scaled Q tile
    ]

    # ---- advisory cost estimate + explicit VMEM budget ----
    param_bytes = sum(int(o.size) * o.dtype.itemsize for o in operands[1:])
    flops = (2 * B * S * E * (2 * E)                  # K/V projection
             + 2 * B * S * E * (E + 2 * Mp)           # Q / inner / gate projection
             + 4 * B * H * S * S * D                  # QK^T and PV
             + 2 * B * S * (Mp + E) * E)              # fused output projection
    transcendentals = B * H * S * S + B * S * Mp
    bytes_accessed = 2 * B * S * E * 4 + param_bytes
    cost = pl.CostEstimate(flops=int(flops), transcendentals=int(transcendentals),
                           bytes_accessed=int(bytes_accessed))

    scratch_bytes = (S * E + 2 * H * S * D + H * TQ * D) * 2
    block_bytes = 2 * (S * E * 4) + 2 * (TQ * E * 4)
    interm_bytes = 2 * H * TQ * S * 4 + 2 * TQ * (E + 2 * Mp) * 4 + S * 2 * E * 4
    est = scratch_bytes + 2 * param_bytes + block_bytes + interm_bytes
    # Capped at 64 MiB so the same budget is valid on v7x; on v5e/v6e (128 MiB
    # physical) it can be raised toward 96-112 MiB for larger sequence tiles.
    vmem_limit = int(min(64 * 2 ** 20, max(32 * 2 ** 20, 2 * est)))

    grid_spec = pltpu.PrefetchScalarGridSpec(
        num_scalar_prefetch=0,
        grid=(B, n_q),
        in_specs=in_specs,
        out_specs=out_specs,
        scratch_shapes=scratch_shapes,
    )
    return pl.pallas_call(
        pab_kernel,
        out_shape=jax.ShapeDtypeStruct((B, S, E), x.dtype),
        grid_spec=grid_spec,
        compiler_params=pltpu.CompilerParams(
            dimension_semantics=("parallel", "arbitrary"),
            vmem_limit_bytes=vmem_limit),
        cost_estimate=cost,
    )(*operands)


def init_params(key, E, H, D, M, num_layers=2):
    """Deterministic synthetic init mirroring the module's __init__ shapes.
    Linear weights: trunc_normal(std = 0.02 / sqrt(2 * num_layers)); biases 0;
    LayerNorm weights 1, biases 0 (PyTorch defaults)."""
    std = 0.02 / math.sqrt(2 * num_layers)
    k_in, k_out = jax.random.split(key)
    sum_dims = 3 * E + 2 * M                       # in_proj_dims = [E, E, E, M, M]
    w_in = jax.random.truncated_normal(k_in, -2.0, 2.0, (sum_dims, E),
                                       jnp.float32) * std
    w_out = jax.random.truncated_normal(k_out, -2.0, 2.0, (E, E + M),
                                        jnp.float32) * std
    zeros = lambda n: jnp.zeros((1, n), jnp.float32)
    ones = lambda n: jnp.ones((1, n), jnp.float32)
    return {
        "in_w": ones(E), "in_b": zeros(E),
        "wq": w_in[0:E].T,             "bq": zeros(E),
        "wk": w_in[E:2 * E].T,         "bk": zeros(E),
        "wv": w_in[2 * E:3 * E].T,     "bv": zeros(E),
        "wm": w_in[3 * E:3 * E + M].T, "bm": zeros(M),
        "wg": w_in[3 * E + M:].T,      "bg": zeros(M),
        "qn_w": ones(D), "qn_b": zeros(D),
        "kn_w": ones(D), "kn_b": zeros(D),
        "wo_attn": w_out[:, :E].T, "wo_mlp": w_out[:, E:].T, "bo": zeros(E),
    }


def ref_forward(x, params, H, D):
    """Pure-JAX reference mirroring the PyTorch forward (for verification)."""
    B, S, E = x.shape
    hi = jax.lax.Precision.HIGHEST

    def ln(v, w, b):
        mu = v.mean(-1, keepdims=True)
        var = ((v - mu) ** 2).mean(-1, keepdims=True)
        return (v - mu) / jnp.sqrt(var + _EPS) * w[0] + b[0]

    y = ln(x, params["in_w"], params["in_b"])
    q = jnp.dot(y, params["wq"], precision=hi) + params["bq"][0]
    k = jnp.dot(y, params["wk"], precision=hi) + params["bk"][0]
    v = jnp.dot(y, params["wv"], precision=hi) + params["bv"][0]
    inner = jnp.dot(y, params["wm"], precision=hi) + params["bm"][0]
    gate = jnp.dot(y, params["wg"], precision=hi) + params["bg"][0]

    q = q.reshape(B, S, H, D).transpose(0, 2, 1, 3)
    k = k.reshape(B, S, H, D).transpose(0, 2, 1, 3)
    v = v.reshape(B, S, H, D).transpose(0, 2, 1, 3)
    q = ln(q, params["qn_w"], params["qn_b"])
    k = ln(k, params["kn_w"], params["kn_b"])

    s = jnp.einsum("bhqd,bhkd->bhqk", q, k, precision=hi) / math.sqrt(D)
    p = jax.nn.softmax(s, axis=-1)
    attn = jnp.einsum("bhqk,bhkd->bhqd", p, v, precision=hi)
    attn = attn.transpose(0, 2, 1, 3).reshape(B, S, H * D)

    act = inner * jax.nn.sigmoid(inner) * gate
    out = (jnp.dot(attn, params["wo_attn"], precision=hi)
           + jnp.dot(act, params["wo_mlp"], precision=hi)
           + params["bo"][0])
    return x + out


def _run_case(key, B, S, E, H, tol):
    D = E // H
    M = int(2.6875 * E)            # mlp_expansion_ratio default
    kx, kp = jax.random.split(key)
    x = jax.random.normal(kx, (B, S, E), jnp.float32)
    params = init_params(kp, E, H, D, M, num_layers=2)

    out = parallel_attention_block(x, params, H, D, M)
    out = jax.block_until_ready(out)
    assert out.shape == (B, S, E), out.shape

    ref = ref_forward(x, params, H, D)
    max_err = float(jnp.max(jnp.abs(out - ref)))
    assert jnp.allclose(out, ref, atol=tol, rtol=tol), (
        f"mismatch: B={B} S={S} E={E} H={H} max_err={max_err}")
    return max_err


if __name__ == "__main__":
    key = jax.random.PRNGKey(0)
    k1, k2 = jax.random.split(key)
    # small config from the module defaults (bf16 MXU inputs -> loosened tolerance)
    _run_case(k1, B=2, S=8, E=32, H=4, tol=2e-2)
    # slightly larger config that exercises the query-tile grid axis (n_q > 1)
    _run_case(k2, B=2, S=256, E=128, H=4, tol=2e-2)
    print("KERNEL_OK")
</pallas_src>

<mosaic_0001>
module attributes {stable_mosaic.version = 11 : i64} {
  func.func @pab_kernel(%arg0: i32, %arg1: i32, %arg2: memref<1x8x32xf32, #tpu.memory_space<vmem>>, %arg3: memref<1x32xf32, #tpu.memory_space<vmem>>, %arg4: memref<1x32xf32, #tpu.memory_space<vmem>>, %arg5: memref<32x64xbf16, #tpu.memory_space<vmem>>, %arg6: memref<1x64xf32, #tpu.memory_space<vmem>>, %arg7: memref<32x288xbf16, #tpu.memory_space<vmem>>, %arg8: memref<1x288xf32, #tpu.memory_space<vmem>>, %arg9: memref<1x8xf32, #tpu.memory_space<vmem>>, %arg10: memref<1x8xf32, #tpu.memory_space<vmem>>, %arg11: memref<1x8xf32, #tpu.memory_space<vmem>>, %arg12: memref<1x8xf32, #tpu.memory_space<vmem>>, %arg13: memref<4x8x32xbf16, #tpu.memory_space<vmem>>, %arg14: memref<128x32xbf16, #tpu.memory_space<vmem>>, %arg15: memref<1x32xf32, #tpu.memory_space<vmem>>, %arg16: memref<1x8x32xf32, #tpu.memory_space<vmem>>, %arg17: memref<8x32xbf16, #tpu.memory_space<vmem>>, %arg18: memref<4x8x8xbf16, #tpu.memory_space<vmem>>, %arg19: memref<4x8x8xbf16, #tpu.memory_space<vmem>>, %arg20: memref<4x8x8xbf16, #tpu.memory_space<vmem>>) attributes {dimension_semantics = [#tpu.dimension_semantics<parallel>, #tpu.dimension_semantics<arbitrary>], iteration_bounds = array<i64: 2, 1>, scalar_prefetch = 0 : i64, scratch_operands = 4 : i64, tpu.core_type = #tpu.core_type<tc>, window_params = [{transform_indices = @transform_0, window_bounds = array<i64: 1, 8, 32>}, {pipeline_mode = #tpu.pipeline_mode<synchronous>, transform_indices = @transform_1, window_bounds = array<i64: 1, 32>}, {pipeline_mode = #tpu.pipeline_mode<synchronous>, transform_indices = @transform_2, window_bounds = array<i64: 1, 32>}, {pipeline_mode = #tpu.pipeline_mode<synchronous>, transform_indices = @transform_3, window_bounds = array<i64: 32, 64>}, {pipeline_mode = #tpu.pipeline_mode<synchronous>, transform_indices = @transform_4, window_bounds = array<i64: 1, 64>}, {pipeline_mode = #tpu.pipeline_mode<synchronous>, transform_indices = @transform_5, window_bounds = array<i64: 32, 288>}, {pipeline_mode = #tpu.pipeline_mode<synchronous>, transform_indices = @transform_6, window_bounds = array<i64: 1, 288>}, {pipeline_mode = #tpu.pipeline_mode<synchronous>, transform_indices = @transform_7, window_bounds = array<i64: 1, 8>}, {pipeline_mode = #tpu.pipeline_mode<synchronous>, transform_indices = @transform_8, window_bounds = array<i64: 1, 8>}, {pipeline_mode = #tpu.pipeline_mode<synchronous>, transform_indices = @transform_9, window_bounds = array<i64: 1, 8>}, {pipeline_mode = #tpu.pipeline_mode<synchronous>, transform_indices = @transform_10, window_bounds = array<i64: 1, 8>}, {pipeline_mode = #tpu.pipeline_mode<synchronous>, transform_indices = @transform_11, window_bounds = array<i64: 4, 8, 32>}, {pipeline_mode = #tpu.pipeline_mode<synchronous>, transform_indices = @transform_12, window_bounds = array<i64: 128, 32>}, {pipeline_mode = #tpu.pipeline_mode<synchronous>, transform_indices = @transform_13, window_bounds = array<i64: 1, 32>}, {transform_indices = @transform_14, window_bounds = array<i64: 1, 8, 32>}]} {
    %c0_i32 = arith.constant 0 : i32
    %0 = arith.cmpi eq, %arg1, %c0_i32 : i32
    %1 = arith.extui %0 : i1 to i32
    %c0_i32_0 = arith.constant 0 : i32
    %2 = arith.cmpi ne, %1, %c0_i32_0 : i32
    scf.if %2 {
      %c0_94 = arith.constant 0 : index
      %c0_95 = arith.constant 0 : index
      %c0_96 = arith.constant 0 : index
      %223 = vector.load %arg2[%c0_94, %c0_95, %c0_96] : memref<1x8x32xf32, #tpu.memory_space<vmem>>, vector<1x8x32xf32>
      %224 = vector.shape_cast %223 : vector<1x8x32xf32> to vector<8x32xf32>
      %c0_97 = arith.constant 0 : index
      %c0_98 = arith.constant 0 : index
      %225 = vector.load %arg3[%c0_97, %c0_98] : memref<1x32xf32, #tpu.memory_space<vmem>>, vector<1x32xf32>
      %226 = vector.shape_cast %225 : vector<1x32xf32> to vector<32xf32>
      %c0_99 = arith.constant 0 : index
      %c0_100 = arith.constant 0 : index
      %227 = vector.load %arg4[%c0_99, %c0_100] : memref<1x32xf32, #tpu.memory_space<vmem>>, vector<1x32xf32>
      %228 = vector.shape_cast %227 : vector<1x32xf32> to vector<32xf32>
      %cst_101 = arith.constant dense<0.000000e+00> : vector<8xf32>
      %229 = vector.multi_reduction <add>, %224, %cst_101 [1] : vector<8x32xf32> to vector<8xf32>
      %230 = vector.shape_cast %229 : vector<8xf32> to vector<8x1xf32>
      %cst_102 = arith.constant 3.200000e+01 : f32
      %231 = vector.broadcast %cst_102 : f32 to vector<8x1xf32>
      %232 = arith.divf %230, %231 : vector<8x1xf32>
      %233 = vector.broadcast %232 : vector<8x1xf32> to vector<8x32xf32>
      %234 = arith.subf %224, %233 : vector<8x32xf32>
      %235 = arith.mulf %234, %234 : vector<8x32xf32>
      %cst_103 = arith.constant dense<0.000000e+00> : vector<8xf32>
      %236 = vector.multi_reduction <add>, %235, %cst_103 [1] : vector<8x32xf32> to vector<8xf32>
      %237 = vector.shape_cast %236 : vector<8xf32> to vector<8x1xf32>
      %cst_104 = arith.constant 3.200000e+01 : f32
      %238 = vector.broadcast %cst_104 : f32 to vector<8x1xf32>
      %239 = arith.divf %237, %238 : vector<8x1xf32>
      %240 = vector.broadcast %232 : vector<8x1xf32> to vector<8x32xf32>
      %241 = arith.subf %224, %240 : vector<8x32xf32>
      %cst_105 = arith.constant 9.99999974E-6 : f32
      %242 = vector.broadcast %cst_105 : f32 to vector<8x1xf32>
      %243 = arith.addf %239, %242 : vector<8x1xf32>
      %244 = math.rsqrt %243 : vector<8x1xf32>
      %245 = vector.broadcast %244 : vector<8x1xf32> to vector<8x32xf32>
      %246 = arith.mulf %241, %245 : vector<8x32xf32>
      %247 = vector.shape_cast %226 : vector<32xf32> to vector<1x32xf32>
      %248 = vector.broadcast %247 : vector<1x32xf32> to vector<8x32xf32>
      %249 = arith.mulf %246, %248 : vector<8x32xf32>
      %250 = vector.shape_cast %228 : vector<32xf32> to vector<1x32xf32>
      %251 = vector.broadcast %250 : vector<1x32xf32> to vector<8x32xf32>
      %252 = arith.addf %249, %251 : vector<8x32xf32>
      %253 = arith.truncf %252 : vector<8x32xf32> to vector<8x32xbf16>
      %c0_106 = arith.constant 0 : index
      %c0_107 = arith.constant 0 : index
      %254 = vector.load %arg17[%c0_106, %c0_107] : memref<8x32xbf16, #tpu.memory_space<vmem>>, vector<8x32xbf16>
      tpu.vector_store %arg17[%c0_106, %c0_107], %253 {strides = array<i32>} : memref<8x32xbf16, #tpu.memory_space<vmem>>, vector<8x32xbf16>,
      %255 = arith.truncf %252 : vector<8x32xf32> to vector<8x32xbf16>
      %c0_108 = arith.constant 0 : index
      %c0_109 = arith.constant 0 : index
      %256 = vector.load %arg5[%c0_108, %c0_109] : memref<32x64xbf16, #tpu.memory_space<vmem>>, vector<32x64xbf16>
      %cst_110 = arith.constant dense<0.000000e+00> : vector<8x64xf32>
      %257 = tpu.matmul %255, %256, %cst_110 {dimension_numbers = #tpu.dot_dimension_numbers<[1], [0], [0], [1], [0, 0, 1, 1], [], []>} : vector<8x32xbf16>, vector<32x64xbf16>, vector<8x64xf32> -> vector<8x64xf32>
      %c0_111 = arith.constant 0 : index
      %c0_112 = arith.constant 0 : index
      %258 = vector.load %arg6[%c0_111, %c0_112] : memref<1x64xf32, #tpu.memory_space<vmem>>, vector<1x64xf32>
      %259 = vector.shape_cast %258 : vector<1x64xf32> to vector<64xf32>
      %260 = vector.shape_cast %259 : vector<64xf32> to vector<1x64xf32>
      %261 = vector.broadcast %260 : vector<1x64xf32> to vector<8x64xf32>
      %262 = arith.addf %257, %261 : vector<8x64xf32>
      %263 = vector.extract_strided_slice %262 {offsets = [0, 0], sizes = [8, 8], strides = [1, 1]} : vector<8x64xf32> to vector<8x8xf32>
      %c0_113 = arith.constant 0 : index
      %c0_114 = arith.constant 0 : index
      %264 = vector.load %arg11[%c0_113, %c0_114] : memref<1x8xf32, #tpu.memory_space<vmem>>, vector<1x8xf32>
      %265 = vector.shape_cast %264 : vector<1x8xf32> to vector<8xf32>
      %c0_115 = arith.constant 0 : index
      %c0_116 = arith.constant 0 : index
      %266 = vector.load %arg12[%c0_115, %c0_116] : memref<1x8xf32, #tpu.memory_space<vmem>>, vector<1x8xf32>
      %267 = vector.shape_cast %266 : vector<1x8xf32> to vector<8xf32>
      %cst_117 = arith.constant dense<0.000000e+00> : vector<8xf32>
      %268 = vector.multi_reduction <add>, %263, %cst_117 [1] : vector<8x8xf32> to vector<8xf32>
      %269 = vector.shape_cast %268 : vector<8xf32> to vector<8x1xf32>
      %cst_118 = arith.constant 8.000000e+00 : f32
      %270 = vector.broadcast %cst_118 : f32 to vector<8x1xf32>
      %271 = arith.divf %269, %270 : vector<8x1xf32>
      %272 = vector.broadcast %271 : vector<8x1xf32> to vector<8x8xf32>
      %273 = arith.subf %263, %272 : vector<8x8xf32>
      %274 = arith.mulf %273, %273 : vector<8x8xf32>
      %cst_119 = arith.constant dense<0.000000e+00> : vector<8xf32>
      %275 = vector.multi_reduction <add>, %274, %cst_119 [1] : vector<8x8xf32> to vector<8xf32>
      %276 = vector.shape_cast %275 : vector<8xf32> to vector<8x1xf32>
      %cst_120 = arith.constant 8.000000e+00 : f32
      %277 = vector.broadcast %cst_120 : f32 to vector<8x1xf32>
      %278 = arith.divf %276, %277 : vector<8x1xf32>
      %279 = vector.broadcast %271 : vector<8x1xf32> to vector<8x8xf32>
      %280 = arith.subf %263, %279 : vector<8x8xf32>
      %cst_121 = arith.constant 9.99999974E-6 : f32
      %281 = vector.broadcast %cst_121 : f32 to vector<8x1xf32>
      %282 = arith.addf %278, %281 : vector<8x1xf32>
      %283 = math.rsqrt %282 : vector<8x1xf32>
      %284 = vector.broadcast %283 : vector<8x1xf32> to vector<8x8xf32>
      %285 = arith.mulf %280, %284 : vector<8x8xf32>
      %286 = vector.shape_cast %265 : vector<8xf32> to vector<1x8xf32>
      %287 = vector.broadcast %286 : vector<1x8xf32> to vector<8x8xf32>
      %288 = arith.mulf %285, %287 : vector<8x8xf32>
      %289 = vector.shape_cast %267 : vector<8xf32> to vector<1x8xf32>
      %290 = vector.broadcast %289 : vector<1x8xf32> to vector<8x8xf32>
      %291 = arith.addf %288, %290 : vector<8x8xf32>
      %292 = arith.truncf %291 : vector<8x8xf32> to vector<8x8xbf16>
      %c0_122 = arith.constant 0 : index
      %c0_123 = arith.constant 0 : index
      %c0_124 = arith.constant 0 : index
      %293 = vector.load %arg18[%c0_122, %c0_123, %c0_124] : memref<4x8x8xbf16, #tpu.memory_space<vmem>>, vector<1x8x8xbf16>
      %294 = vector.shape_cast %293 : vector<1x8x8xbf16> to vector<8x8xbf16>
      %295 = vector.shape_cast %292 : vector<8x8xbf16> to vector<1x8x8xbf16>
      tpu.vector_store %arg18[%c0_122, %c0_123, %c0_124], %295 {strides = array<i32>} : memref<4x8x8xbf16, #tpu.memory_space<vmem>>, vector<1x8x8xbf16>,
      %296 = vector.extract_strided_slice %262 {offsets = [0, 32], sizes = [8, 8], strides = [1, 1]} : vector<8x64xf32> to vector<8x8xf32>
      %297 = arith.truncf %296 : vector<8x8xf32> to vector<8x8xbf16>
      %c0_125 = arith.constant 0 : index
      %c0_126 = arith.constant 0 : index
      %c0_127 = arith.constant 0 : index
      %298 = vector.load %arg19[%c0_125, %c0_126, %c0_127] : memref<4x8x8xbf16, #tpu.memory_space<vmem>>, vector<1x8x8xbf16>
      %299 = vector.shape_cast %298 : vector<1x8x8xbf16> to vector<8x8xbf16>
      %300 = vector.shape_cast %297 : vector<8x8xbf16> to vector<1x8x8xbf16>
      tpu.vector_store %arg19[%c0_125, %c0_126, %c0_127], %300 {strides = array<i32>} : memref<4x8x8xbf16, #tpu.memory_space<vmem>>, vector<1x8x8xbf16>,
      %301 = vector.extract_strided_slice %262 {offsets = [0, 8], sizes = [8, 8], strides = [1, 1]} : vector<8x64xf32> to vector<8x8xf32>
      %c0_128 = arith.constant 0 : index
      %c0_129 = arith.constant 0 : index
      %302 = vector.load %arg11[%c0_128, %c0_129] : memref<1x8xf32, #tpu.memory_space<vmem>>, vector<1x8xf32>
      %303 = vector.shape_cast %302 : vector<1x8xf32> to vector<8xf32>
      %c0_130 = arith.constant 0 : index
      %c0_131 = arith.constant 0 : index
      %304 = vector.load %arg12[%c0_130, %c0_131] : memref<1x8xf32, #tpu.memory_space<vmem>>, vector<1x8xf32>
      %305 = vector.shape_cast %304 : vector<1x8xf32> to vector<8xf32>
      %cst_132 = arith.constant dense<0.000000e+00> : vector<8xf32>
      %306 = vector.multi_reduction <add>, %301, %cst_132 [1] : vector<8x8xf32> to vector<8xf32>
      %307 = vector.shape_cast %306 : vector<8xf32> to vector<8x1xf32>
      %cst_133 = arith.constant 8.000000e+00 : f32
      %308 = vector.broadcast %cst_133 : f32 to vector<8x1xf32>
      %309 = arith.divf %307, %308 : vector<8x1xf32>
      %310 = vector.broadcast %309 : vector<8x1xf32> to vector<8x8xf32>
      %311 = arith.subf %301, %310 : vector<8x8xf32>
      %312 = arith.mulf %311, %311 : vector<8x8xf32>
      %cst_134 = arith.constant dense<0.000000e+00> : vector<8xf32>
      %313 = vector.multi_reduction <add>, %312, %cst_134 [1] : vector<8x8xf32> to vector<8xf32>
      %314 = vector.shape_cast %313 : vector<8xf32> to vector<8x1xf32>
      %cst_135 = arith.constant 8.000000e+00 : f32
      %315 = vector.broadcast %cst_135 : f32 to vector<8x1xf32>
      %316 = arith.divf %314, %315 : vector<8x1xf32>
      %317 = vector.broadcast %309 : vector<8x1xf32> to vector<8x8xf32>
      %318 = arith.subf %301, %317 : vector<8x8xf32>
      %cst_136 = arith.constant 9.99999974E-6 : f32
      %319 = vector.broadcast %cst_136 : f32 to vector<8x1xf32>
      %320 = arith.addf %316, %319 : vector<8x1xf32>
      %321 = math.rsqrt %320 : vector<8x1xf32>
      %322 = vector.broadcast %321 : vector<8x1xf32> to vector<8x8xf32>
      %323 = arith.mulf %318, %322 : vector<8x8xf32>
      %324 = vector.shape_cast %303 : vector<8xf32> to vector<1x8xf32>
      %325 = vector.broadcast %324 : vector<1x8xf32> to vector<8x8xf32>
      %326 = arith.mulf %323, %325 : vector<8x8xf32>
      %327 = vector.shape_cast %305 : vector<8xf32> to vector<1x8xf32>
      %328 = vector.broadcast %327 : vector<1x8xf32> to vector<8x8xf32>
      %329 = arith.addf %326, %328 : vector<8x8xf32>
      %330 = arith.truncf %329 : vector<8x8xf32> to vector<8x8xbf16>
      %c1_137 = arith.constant 1 : index
      %c0_138 = arith.constant 0 : index
      %c0_139 = arith.constant 0 : index
      %331 = vector.load %arg18[%c1_137, %c0_138, %c0_139] : memref<4x8x8xbf16, #tpu.memory_space<vmem>>, vector<1x8x8xbf16>
      %332 = vector.shape_cast %331 : vector<1x8x8xbf16> to vector<8x8xbf16>
      %333 = vector.shape_cast %330 : vector<8x8xbf16> to vector<1x8x8xbf16>
      tpu.vector_store %arg18[%c1_137, %c0_138, %c0_139], %333 {strides = array<i32>} : memref<4x8x8xbf16, #tpu.memory_space<vmem>>, vector<1x8x8xbf16>,
      %334 = vector.extract_strided_slice %262 {offsets = [0, 40], sizes = [8, 8], strides = [1, 1]} : vector<8x64xf32> to vector<8x8xf32>
      %335 = arith.truncf %334 : vector<8x8xf32> to vector<8x8xbf16>
      %c1_140 = arith.constant 1 : index
      %c0_141 = arith.constant 0 : index
      %c0_142 = arith.constant 0 : index
      %336 = vector.load %arg19[%c1_140, %c0_141, %c0_142] : memref<4x8x8xbf16, #tpu.memory_space<vmem>>, vector<1x8x8xbf16>
      %337 = vector.shape_cast %336 : vector<1x8x8xbf16> to vector<8x8xbf16>
      %338 = vector.shape_cast %335 : vector<8x8xbf16> to vector<1x8x8xbf16>
      tpu.vector_store %arg19[%c1_140, %c0_141, %c0_142], %338 {strides = array<i32>} : memref<4x8x8xbf16, #tpu.memory_space<vmem>>, vector<1x8x8xbf16>,
      %339 = vector.extract_strided_slice %262 {offsets = [0, 16], sizes = [8, 8], strides = [1, 1]} : vector<8x64xf32> to vector<8x8xf32>
      %c0_143 = arith.constant 0 : index
      %c0_144 = arith.constant 0 : index
      %340 = vector.load %arg11[%c0_143, %c0_144] : memref<1x8xf32, #tpu.memory_space<vmem>>, vector<1x8xf32>
      %341 = vector.shape_cast %340 : vector<1x8xf32> to vector<8xf32>
      %c0_145 = arith.constant 0 : index
      %c0_146 = arith.constant 0 : index
      %342 = vector.load %arg12[%c0_145, %c0_146] : memref<1x8xf32, #tpu.memory_space<vmem>>, vector<1x8xf32>
      %343 = vector.shape_cast %342 : vector<1x8xf32> to vector<8xf32>
      %cst_147 = arith.constant dense<0.000000e+00> : vector<8xf32>
      %344 = vector.multi_reduction <add>, %339, %cst_147 [1] : vector<8x8xf32> to vector<8xf32>
      %345 = vector.shape_cast %344 : vector<8xf32> to vector<8x1xf32>
      %cst_148 = arith.constant 8.000000e+00 : f32
      %346 = vector.broadcast %cst_148 : f32 to vector<8x1xf32>
      %347 = arith.divf %345, %346 : vector<8x1xf32>
      %348 = vector.broadcast %347 : vector<8x1xf32> to vector<8x8xf32>
      %349 = arith.subf %339, %348 : vector<8x8xf32>
      %350 = arith.mulf %349, %349 : vector<8x8xf32>
      %cst_149 = arith.constant dense<0.000000e+00> : vector<8xf32>
      %351 = vector.multi_reduction <add>, %350, %cst_149 [1] : vector<8x8xf32> to vector<8xf32>
      %352 = vector.shape_cast %351 : vector<8xf32> to vector<8x1xf32>
      %cst_150 = arith.constant 8.000000e+00 : f32
      %353 = vector.broadcast %cst_150 : f32 to vector<8x1xf32>
      %354 = arith.divf %352, %353 : vector<8x1xf32>
      %355 = vector.broadcast %347 : vector<8x1xf32> to vector<8x8xf32>
      %356 = arith.subf %339, %355 : vector<8x8xf32>
      %cst_151 = arith.constant 9.99999974E-6 : f32
      %357 = vector.broadcast %cst_151 : f32 to vector<8x1xf32>
      %358 = arith.addf %354, %357 : vector<8x1xf32>
      %359 = math.rsqrt %358 : vector<8x1xf32>
      %360 = vector.broadcast %359 : vector<8x1xf32> to vector<8x8xf32>
      %361 = arith.mulf %356, %360 : vector<8x8xf32>
      %362 = vector.shape_cast %341 : vector<8xf32> to vector<1x8xf32>
      %363 = vector.broadcast %362 : vector<1x8xf32> to vector<8x8xf32>
      %364 = arith.mulf %361, %363 : vector<8x8xf32>
      %365 = vector.shape_cast %343 : vector<8xf32> to vector<1x8xf32>
      %366 = vector.broadcast %365 : vector<1x8xf32> to vector<8x8xf32>
      %367 = arith.addf %364, %366 : vector<8x8xf32>
      %368 = arith.truncf %367 : vector<8x8xf32> to vector<8x8xbf16>
      %c2_152 = arith.constant 2 : index
      %c0_153 = arith.constant 0 : index
      %c0_154 = arith.constant 0 : index
      %369 = vector.load %arg18[%c2_152, %c0_153, %c0_154] : memref<4x8x8xbf16, #tpu.memory_space<vmem>>, vector<1x8x8xbf16>
      %370 = vector.shape_cast %369 : vector<1x8x8xbf16> to vector<8x8xbf16>
      %371 = vector.shape_cast %368 : vector<8x8xbf16> to vector<1x8x8xbf16>
      tpu.vector_store %arg18[%c2_152, %c0_153, %c0_154], %371 {strides = array<i32>} : memref<4x8x8xbf16, #tpu.memory_space<vmem>>, vector<1x8x8xbf16>,
      %372 = vector.extract_strided_slice %262 {offsets = [0, 48], sizes = [8, 8], strides = [1, 1]} : vector<8x64xf32> to vector<8x8xf32>
      %373 = arith.truncf %372 : vector<8x8xf32> to vector<8x8xbf16>
      %c2_155 = arith.constant 2 : index
      %c0_156 = arith.constant 0 : index
      %c0_157 = arith.constant 0 : index
      %374 = vector.load %arg19[%c2_155, %c0_156, %c0_157] : memref<4x8x8xbf16, #tpu.memory_space<vmem>>, vector<1x8x8xbf16>
      %375 = vector.shape_cast %374 : vector<1x8x8xbf16> to vector<8x8xbf16>
      %376 = vector.shape_cast %373 : vector<8x8xbf16> to vector<1x8x8xbf16>
      tpu.vector_store %arg19[%c2_155, %c0_156, %c0_157], %376 {strides = array<i32>} : memref<4x8x8xbf16, #tpu.memory_space<vmem>>, vector<1x8x8xbf16>,
      %377 = vector.extract_strided_slice %262 {offsets = [0, 24], sizes = [8, 8], strides = [1, 1]} : vector<8x64xf32> to vector<8x8xf32>
      %c0_158 = arith.constant 0 : index
      %c0_159 = arith.constant 0 : index
      %378 = vector.load %arg11[%c0_158, %c0_159] : memref<1x8xf32, #tpu.memory_space<vmem>>, vector<1x8xf32>
      %379 = vector.shape_cast %378 : vector<1x8xf32> to vector<8xf32>
      %c0_160 = arith.constant 0 : index
      %c0_161 = arith.constant 0 : index
      %380 = vector.load %arg12[%c0_160, %c0_161] : memref<1x8xf32, #tpu.memory_space<vmem>>, vector<1x8xf32>
      %381 = vector.shape_cast %380 : vector<1x8xf32> to vector<8xf32>
      %cst_162 = arith.constant dense<0.000000e+00> : vector<8xf32>
      %382 = vector.multi_reduction <add>, %377, %cst_162 [1] : vector<8x8xf32> to vector<8xf32>
      %383 = vector.shape_cast %382 : vector<8xf32> to vector<8x1xf32>
      %cst_163 = arith.constant 8.000000e+00 : f32
      %384 = vector.broadcast %cst_163 : f32 to vector<8x1xf32>
      %385 = arith.divf %383, %384 : vector<8x1xf32>
      %386 = vector.broadcast %385 : vector<8x1xf32> to vector<8x8xf32>
      %387 = arith.subf %377, %386 : vector<8x8xf32>
      %388 = arith.mulf %387, %387 : vector<8x8xf32>
      %cst_164 = arith.constant dense<0.000000e+00> : vector<8xf32>
      %389 = vector.multi_reduction <add>, %388, %cst_164 [1] : vector<8x8xf32> to vector<8xf32>
      %390 = vector.shape_cast %389 : vector<8xf32> to vector<8x1xf32>
      %cst_165 = arith.constant 8.000000e+00 : f32
      %391 = vector.broadcast %cst_165 : f32 to vector<8x1xf32>
      %392 = arith.divf %390, %391 : vector<8x1xf32>
      %393 = vector.broadcast %385 : vector<8x1xf32> to vector<8x8xf32>
      %394 = arith.subf %377, %393 : vector<8x8xf32>
      %cst_166 = arith.constant 9.99999974E-6 : f32
      %395 = vector.broadcast %cst_166 : f32 to vector<8x1xf32>
      %396 = arith.addf %392, %395 : vector<8x1xf32>
      %397 = math.rsqrt %396 : vector<8x1xf32>
      %398 = vector.broadcast %397 : vector<8x1xf32> to vector<8x8xf32>
      %399 = arith.mulf %394, %398 : vector<8x8xf32>
      %400 = vector.shape_cast %379 : vector<8xf32> to vector<1x8xf32>
      %401 = vector.broadcast %400 : vector<1x8xf32> to vector<8x8xf32>
      %402 = arith.mulf %399, %401 : vector<8x8xf32>
      %403 = vector.shape_cast %381 : vector<8xf32> to vector<1x8xf32>
      %404 = vector.broadcast %403 : vector<1x8xf32> to vector<8x8xf32>
      %405 = arith.addf %402, %404 : vector<8x8xf32>
      %406 = arith.truncf %405 : vector<8x8xf32> to vector<8x8xbf16>
      %c3_167 = arith.constant 3 : index
      %c0_168 = arith.constant 0 : index
      %c0_169 = arith.constant 0 : index
      %407 = vector.load %arg18[%c3_167, %c0_168, %c0_169] : memref<4x8x8xbf16, #tpu.memory_space<vmem>>, vector<1x8x8xbf16>
      %408 = vector.shape_cast %407 : vector<1x8x8xbf16> to vector<8x8xbf16>
      %409 = vector.shape_cast %406 : vector<8x8xbf16> to vector<1x8x8xbf16>
      tpu.vector_store %arg18[%c3_167, %c0_168, %c0_169], %409 {strides = array<i32>} : memref<4x8x8xbf16, #tpu.memory_space<vmem>>, vector<1x8x8xbf16>,
      %410 = vector.extract_strided_slice %262 {offsets = [0, 56], sizes = [8, 8], strides = [1, 1]} : vector<8x64xf32> to vector<8x8xf32>
      %411 = arith.truncf %410 : vector<8x8xf32> to vector<8x8xbf16>
      %c3_170 = arith.constant 3 : index
      %c0_171 = arith.constant 0 : index
      %c0_172 = arith.constant 0 : index
      %412 = vector.load %arg19[%c3_170, %c0_171, %c0_172] : memref<4x8x8xbf16, #tpu.memory_space<vmem>>, vector<1x8x8xbf16>
      %413 = vector.shape_cast %412 : vector<1x8x8xbf16> to vector<8x8xbf16>
      %414 = vector.shape_cast %411 : vector<8x8xbf16> to vector<1x8x8xbf16>
      tpu.vector_store %arg19[%c3_170, %c0_171, %c0_172], %414 {strides = array<i32>} : memref<4x8x8xbf16, #tpu.memory_space<vmem>>, vector<1x8x8xbf16>,
    } else {
    }
    %c8_i32 = arith.constant 8 : i32
    %3 = arith.muli %arg1, %c8_i32 : i32
    %4 = tpu.assume_multiple %3, 8 : i32
    %5 = arith.index_cast %4 : i32 to index
    %c0 = arith.constant 0 : index
    %6 = vector.load %arg17[%5, %c0] : memref<8x32xbf16, #tpu.memory_space<vmem>>, vector<8x32xbf16>
    %c0_1 = arith.constant 0 : index
    %c0_2 = arith.constant 0 : index
    %7 = vector.load %arg7[%c0_1, %c0_2] : memref<32x288xbf16, #tpu.memory_space<vmem>>, vector<32x288xbf16>
    %cst = arith.constant dense<0.000000e+00> : vector<8x288xf32>
    %8 = tpu.matmul %6, %7, %cst {dimension_numbers = #tpu.dot_dimension_numbers<[1], [0], [0], [1], [0, 0, 1, 1], [], []>} : vector<8x32xbf16>, vector<32x288xbf16>, vector<8x288xf32> -> vector<8x288xf32>
    %c0_3 = arith.constant 0 : index
    %c0_4 = arith.constant 0 : index
    %9 = vector.load %arg8[%c0_3, %c0_4] : memref<1x288xf32, #tpu.memory_space<vmem>>, vector<1x288xf32>
    %10 = vector.shape_cast %9 : vector<1x288xf32> to vector<288xf32>
    %11 = vector.shape_cast %10 : vector<288xf32> to vector<1x288xf32>
    %12 = vector.broadcast %11 : vector<1x288xf32> to vector<8x288xf32>
    %13 = arith.addf %8, %12 : vector<8x288xf32>
    %14 = vector.extract_strided_slice %13 {offsets = [0, 0], sizes = [8, 32], strides = [1, 1]} : vector<8x288xf32> to vector<8x32xf32>
    %15 = vector.extract_strided_slice %13 {offsets = [0, 32], sizes = [8, 128], strides = [1, 1]} : vector<8x288xf32> to vector<8x128xf32>
    %16 = vector.extract_strided_slice %13 {offsets = [0, 160], sizes = [8, 128], strides = [1, 1]} : vector<8x288xf32> to vector<8x128xf32>
    %17 = vector.extract_strided_slice %14 {offsets = [0, 0], sizes = [8, 8], strides = [1, 1]} : vector<8x32xf32> to vector<8x8xf32>
    %c0_5 = arith.constant 0 : index
    %c0_6 = arith.constant 0 : index
    %18 = vector.load %arg9[%c0_5, %c0_6] : memref<1x8xf32, #tpu.memory_space<vmem>>, vector<1x8xf32>
    %19 = vector.shape_cast %18 : vector<1x8xf32> to vector<8xf32>
    %c0_7 = arith.constant 0 : index
    %c0_8 = arith.constant 0 : index
    %20 = vector.load %arg10[%c0_7, %c0_8] : memref<1x8xf32, #tpu.memory_space<vmem>>, vector<1x8xf32>
    %21 = vector.shape_cast %20 : vector<1x8xf32> to vector<8xf32>
    %cst_9 = arith.constant dense<0.000000e+00> : vector<8xf32>
    %22 = vector.multi_reduction <add>, %17, %cst_9 [1] : vector<8x8xf32> to vector<8xf32>
    %23 = vector.shape_cast %22 : vector<8xf32> to vector<8x1xf32>
    %cst_10 = arith.constant 8.000000e+00 : f32
    %24 = vector.broadcast %cst_10 : f32 to vector<8x1xf32>
    %25 = arith.divf %23, %24 : vector<8x1xf32>
    %26 = vector.broadcast %25 : vector<8x1xf32> to vector<8x8xf32>
    %27 = arith.subf %17, %26 : vector<8x8xf32>
    %28 = arith.mulf %27, %27 : vector<8x8xf32>
    %cst_11 = arith.constant dense<0.000000e+00> : vector<8xf32>
    %29 = vector.multi_reduction <add>, %28, %cst_11 [1] : vector<8x8xf32> to vector<8xf32>
    %30 = vector.shape_cast %29 : vector<8xf32> to vector<8x1xf32>
    %cst_12 = arith.constant 8.000000e+00 : f32
    %31 = vector.broadcast %cst_12 : f32 to vector<8x1xf32>
    %32 = arith.divf %30, %31 : vector<8x1xf32>
    %33 = vector.broadcast %25 : vector<8x1xf32> to vector<8x8xf32>
    %34 = arith.subf %17, %33 : vector<8x8xf32>
    %cst_13 = arith.constant 9.99999974E-6 : f32
    %35 = vector.broadcast %cst_13 : f32 to vector<8x1xf32>
    %36 = arith.addf %32, %35 : vector<8x1xf32>
    %37 = math.rsqrt %36 : vector<8x1xf32>
    %38 = vector.broadcast %37 : vector<8x1xf32> to vector<8x8xf32>
    %39 = arith.mulf %34, %38 : vector<8x8xf32>
    %40 = vector.shape_cast %19 : vector<8xf32> to vector<1x8xf32>
    %41 = vector.broadcast %40 : vector<1x8xf32> to vector<8x8xf32>
    %42 = arith.mulf %39, %41 : vector<8x8xf32>
    %43 = vector.shape_cast %21 : vector<8xf32> to vector<1x8xf32>
    %44 = vector.broadcast %43 : vector<1x8xf32> to vector<8x8xf32>
    %45 = arith.addf %42, %44 : vector<8x8xf32>
    %cst_14 = arith.constant 0.353553385 : f32
    %46 = vector.broadcast %cst_14 : f32 to vector<8x8xf32>
    %47 = arith.mulf %45, %46 : vector<8x8xf32>
    %48 = arith.truncf %47 : vector<8x8xf32> to vector<8x8xbf16>
    %c0_15 = arith.constant 0 : index
    %c0_16 = arith.constant 0 : index
    %c0_17 = arith.constant 0 : index
    %49 = vector.load %arg20[%c0_15, %c0_16, %c0_17] : memref<4x8x8xbf16, #tpu.memory_space<vmem>>, vector<1x8x8xbf16>
    %50 = vector.shape_cast %49 : vector<1x8x8xbf16> to vector<8x8xbf16>
    %51 = vector.shape_cast %48 : vector<8x8xbf16> to vector<1x8x8xbf16>
    tpu.vector_store %arg20[%c0_15, %c0_16, %c0_17], %51 {strides = array<i32>} : memref<4x8x8xbf16, #tpu.memory_space<vmem>>, vector<1x8x8xbf16>,
    %52 = vector.extract_strided_slice %14 {offsets = [0, 8], sizes = [8, 8], strides = [1, 1]} : vector<8x32xf32> to vector<8x8xf32>
    %c0_18 = arith.constant 0 : index
    %c0_19 = arith.constant 0 : index
    %53 = vector.load %arg9[%c0_18, %c0_19] : memref<1x8xf32, #tpu.memory_space<vmem>>, vector<1x8xf32>
    %54 = vector.shape_cast %53 : vector<1x8xf32> to vector<8xf32>
    %c0_20 = arith.constant 0 : index
    %c0_21 = arith.constant 0 : index
    %55 = vector.load %arg10[%c0_20, %c0_21] : memref<1x8xf32, #tpu.memory_space<vmem>>, vector<1x8xf32>
    %56 = vector.shape_cast %55 : vector<1x8xf32> to vector<8xf32>
    %cst_22 = arith.constant dense<0.000000e+00> : vector<8xf32>
    %57 = vector.multi_reduction <add>, %52, %cst_22 [1] : vector<8x8xf32> to vector<8xf32>
    %58 = vector.shape_cast %57 : vector<8xf32> to vector<8x1xf32>
    %cst_23 = arith.constant 8.000000e+00 : f32
    %59 = vector.broadcast %cst_23 : f32 to vector<8x1xf32>
    %60 = arith.divf %58, %59 : vector<8x1xf32>
    %61 = vector.broadcast %60 : vector<8x1xf32> to vector<8x8xf32>
    %62 = arith.subf %52, %61 : vector<8x8xf32>
    %63 = arith.mulf %62, %62 : vector<8x8xf32>
    %cst_24 = arith.constant dense<0.000000e+00> : vector<8xf32>
    %64 = vector.multi_reduction <add>, %63, %cst_24 [1] : vector<8x8xf32> to vector<8xf32>
    %65 = vector.shape_cast %64 : vector<8xf32> to vector<8x1xf32>
    %cst_25 = arith.constant 8.000000e+00 : f32
    %66 = vector.broadcast %cst_25 : f32 to vector<8x1xf32>
    %67 = arith.divf %65, %66 : vector<8x1xf32>
    %68 = vector.broadcast %60 : vector<8x1xf32> to vector<8x8xf32>
    %69 = arith.subf %52, %68 : vector<8x8xf32>
    %cst_26 = arith.constant 9.99999974E-6 : f32
    %70 = vector.broadcast %cst_26 : f32 to vector<8x1xf32>
    %71 = arith.addf %67, %70 : vector<8x1xf32>
    %72 = math.rsqrt %71 : vector<8x1xf32>
    %73 = vector.broadcast %72 : vector<8x1xf32> to vector<8x8xf32>
    %74 = arith.mulf %69, %73 : vector<8x8xf32>
    %75 = vector.shape_cast %54 : vector<8xf32> to vector<1x8xf32>
    %76 = vector.broadcast %75 : vector<1x8xf32> to vector<8x8xf32>
    %77 = arith.mulf %74, %76 : vector<8x8xf32>
    %78 = vector.shape_cast %56 : vector<8xf32> to vector<1x8xf32>
    %79 = vector.broadcast %78 : vector<1x8xf32> to vector<8x8xf32>
    %80 = arith.addf %77, %79 : vector<8x8xf32>
    %cst_27 = arith.constant 0.353553385 : f32
    %81 = vector.broadcast %cst_27 : f32 to vector<8x8xf32>
    %82 = arith.mulf %80, %81 : vector<8x8xf32>
    %83 = arith.truncf %82 : vector<8x8xf32> to vector<8x8xbf16>
    %c1 = arith.constant 1 : index
    %c0_28 = arith.constant 0 : index
    %c0_29 = arith.constant 0 : index
    %84 = vector.load %arg20[%c1, %c0_28, %c0_29] : memref<4x8x8xbf16, #tpu.memory_space<vmem>>, vector<1x8x8xbf16>
    %85 = vector.shape_cast %84 : vector<1x8x8xbf16> to vector<8x8xbf16>
    %86 = vector.shape_cast %83 : vector<8x8xbf16> to vector<1x8x8xbf16>
    tpu.vector_store %arg20[%c1, %c0_28, %c0_29], %86 {strides = array<i32>} : memref<4x8x8xbf16, #tpu.memory_space<vmem>>, vector<1x8x8xbf16>,
    %87 = vector.extract_strided_slice %14 {offsets = [0, 16], sizes = [8, 8], strides = [1, 1]} : vector<8x32xf32> to vector<8x8xf32>
    %c0_30 = arith.constant 0 : index
    %c0_31 = arith.constant 0 : index
    %88 = vector.load %arg9[%c0_30, %c0_31] : memref<1x8xf32, #tpu.memory_space<vmem>>, vector<1x8xf32>
    %89 = vector.shape_cast %88 : vector<1x8xf32> to vector<8xf32>
    %c0_32 = arith.constant 0 : index
    %c0_33 = arith.constant 0 : index
    %90 = vector.load %arg10[%c0_32, %c0_33] : memref<1x8xf32, #tpu.memory_space<vmem>>, vector<1x8xf32>
    %91 = vector.shape_cast %90 : vector<1x8xf32> to vector<8xf32>
    %cst_34 = arith.constant dense<0.000000e+00> : vector<8xf32>
    %92 = vector.multi_reduction <add>, %87, %cst_34 [1] : vector<8x8xf32> to vector<8xf32>
    %93 = vector.shape_cast %92 : vector<8xf32> to vector<8x1xf32>
    %cst_35 = arith.constant 8.000000e+00 : f32
    %94 = vector.broadcast %cst_35 : f32 to vector<8x1xf32>
    %95 = arith.divf %93, %94 : vector<8x1xf32>
    %96 = vector.broadcast %95 : vector<8x1xf32> to vector<8x8xf32>
    %97 = arith.subf %87, %96 : vector<8x8xf32>
    %98 = arith.mulf %97, %97 : vector<8x8xf32>
    %cst_36 = arith.constant dense<0.000000e+00> : vector<8xf32>
    %99 = vector.multi_reduction <add>, %98, %cst_36 [1] : vector<8x8xf32> to vector<8xf32>
    %100 = vector.shape_cast %99 : vector<8xf32> to vector<8x1xf32>
    %cst_37 = arith.constant 8.000000e+00 : f32
    %101 = vector.broadcast %cst_37 : f32 to vector<8x1xf32>
    %102 = arith.divf %100, %101 : vector<8x1xf32>
    %103 = vector.broadcast %95 : vector<8x1xf32> to vector<8x8xf32>
    %104 = arith.subf %87, %103 : vector<8x8xf32>
    %cst_38 = arith.constant 9.99999974E-6 : f32
    %105 = vector.broadcast %cst_38 : f32 to vector<8x1xf32>
    %106 = arith.addf %102, %105 : vector<8x1xf32>
    %107 = math.rsqrt %106 : vector<8x1xf32>
    %108 = vector.broadcast %107 : vector<8x1xf32> to vector<8x8xf32>
    %109 = arith.mulf %104, %108 : vector<8x8xf32>
    %110 = vector.shape_cast %89 : vector<8xf32> to vector<1x8xf32>
    %111 = vector.broadcast %110 : vector<1x8xf32> to vector<8x8xf32>
    %112 = arith.mulf %109, %111 : vector<8x8xf32>
    %113 = vector.shape_cast %91 : vector<8xf32> to vector<1x8xf32>
    %114 = vector.broadcast %113 : vector<1x8xf32> to vector<8x8xf32>
    %115 = arith.addf %112, %114 : vector<8x8xf32>
    %cst_39 = arith.constant 0.353553385 : f32
    %116 = vector.broadcast %cst_39 : f32 to vector<8x8xf32>
    %117 = arith.mulf %115, %116 : vector<8x8xf32>
    %118 = arith.truncf %117 : vector<8x8xf32> to vector<8x8xbf16>
    %c2 = arith.constant 2 : index
    %c0_40 = arith.constant 0 : index
    %c0_41 = arith.constant 0 : index
    %119 = vector.load %arg20[%c2, %c0_40, %c0_41] : memref<4x8x8xbf16, #tpu.memory_space<vmem>>, vector<1x8x8xbf16>
    %120 = vector.shape_cast %119 : vector<1x8x8xbf16> to vector<8x8xbf16>
    %121 = vector.shape_cast %118 : vector<8x8xbf16> to vector<1x8x8xbf16>
    tpu.vector_store %arg20[%c2, %c0_40, %c0_41], %121 {strides = array<i32>} : memref<4x8x8xbf16, #tpu.memory_space<vmem>>, vector<1x8x8xbf16>,
    %122 = vector.extract_strided_slice %14 {offsets = [0, 24], sizes = [8, 8], strides = [1, 1]} : vector<8x32xf32> to vector<8x8xf32>
    %c0_42 = arith.constant 0 : index
    %c0_43 = arith.constant 0 : index
    %123 = vector.load %arg9[%c0_42, %c0_43] : memref<1x8xf32, #tpu.memory_space<vmem>>, vector<1x8xf32>
    %124 = vector.shape_cast %123 : vector<1x8xf32> to vector<8xf32>
    %c0_44 = arith.constant 0 : index
    %c0_45 = arith.constant 0 : index
    %125 = vector.load %arg10[%c0_44, %c0_45] : memref<1x8xf32, #tpu.memory_space<vmem>>, vector<1x8xf32>
    %126 = vector.shape_cast %125 : vector<1x8xf32> to vector<8xf32>
    %cst_46 = arith.constant dense<0.000000e+00> : vector<8xf32>
    %127 = vector.multi_reduction <add>, %122, %cst_46 [1] : vector<8x8xf32> to vector<8xf32>
    %128 = vector.shape_cast %127 : vector<8xf32> to vector<8x1xf32>
    %cst_47 = arith.constant 8.000000e+00 : f32
    %129 = vector.broadcast %cst_47 : f32 to vector<8x1xf32>
    %130 = arith.divf %128, %129 : vector<8x1xf32>
    %131 = vector.broadcast %130 : vector<8x1xf32> to vector<8x8xf32>
    %132 = arith.subf %122, %131 : vector<8x8xf32>
    %133 = arith.mulf %132, %132 : vector<8x8xf32>
    %cst_48 = arith.constant dense<0.000000e+00> : vector<8xf32>
    %134 = vector.multi_reduction <add>, %133, %cst_48 [1] : vector<8x8xf32> to vector<8xf32>
    %135 = vector.shape_cast %134 : vector<8xf32> to vector<8x1xf32>
    %cst_49 = arith.constant 8.000000e+00 : f32
    %136 = vector.broadcast %cst_49 : f32 to vector<8x1xf32>
    %137 = arith.divf %135, %136 : vector<8x1xf32>
    %138 = vector.broadcast %130 : vector<8x1xf32> to vector<8x8xf32>
    %139 = arith.subf %122, %138 : vector<8x8xf32>
    %cst_50 = arith.constant 9.99999974E-6 : f32
    %140 = vector.broadcast %cst_50 : f32 to vector<8x1xf32>
    %141 = arith.addf %137, %140 : vector<8x1xf32>
    %142 = math.rsqrt %141 : vector<8x1xf32>
    %143 = vector.broadcast %142 : vector<8x1xf32> to vector<8x8xf32>
    %144 = arith.mulf %139, %143 : vector<8x8xf32>
    %145 = vector.shape_cast %124 : vector<8xf32> to vector<1x8xf32>
    %146 = vector.broadcast %145 : vector<1x8xf32> to vector<8x8xf32>
    %147 = arith.mulf %144, %146 : vector<8x8xf32>
    %148 = vector.shape_cast %126 : vector<8xf32> to vector<1x8xf32>
    %149 = vector.broadcast %148 : vector<1x8xf32> to vector<8x8xf32>
    %150 = arith.addf %147, %149 : vector<8x8xf32>
    %cst_51 = arith.constant 0.353553385 : f32
    %151 = vector.broadcast %cst_51 : f32 to vector<8x8xf32>
    %152 = arith.mulf %150, %151 : vector<8x8xf32>
    %153 = arith.truncf %152 : vector<8x8xf32> to vector<8x8xbf16>
    %c3 = arith.constant 3 : index
    %c0_52 = arith.constant 0 : index
    %c0_53 = arith.constant 0 : index
    %154 = vector.load %arg20[%c3, %c0_52, %c0_53] : memref<4x8x8xbf16, #tpu.memory_space<vmem>>, vector<1x8x8xbf16>
    %155 = vector.shape_cast %154 : vector<1x8x8xbf16> to vector<8x8xbf16>
    %156 = vector.shape_cast %153 : vector<8x8xbf16> to vector<1x8x8xbf16>
    tpu.vector_store %arg20[%c3, %c0_52, %c0_53], %156 {strides = array<i32>} : memref<4x8x8xbf16, #tpu.memory_space<vmem>>, vector<1x8x8xbf16>,
    %c0_54 = arith.constant 0 : index
    %c0_55 = arith.constant 0 : index
    %c0_56 = arith.constant 0 : index
    %157 = vector.load %arg20[%c0_54, %c0_55, %c0_56] : memref<4x8x8xbf16, #tpu.memory_space<vmem>>, vector<4x8x8xbf16>
    %c0_57 = arith.constant 0 : index
    %c0_58 = arith.constant 0 : index
    %c0_59 = arith.constant 0 : index
    %158 = vector.load %arg18[%c0_57, %c0_58, %c0_59] : memref<4x8x8xbf16, #tpu.memory_space<vmem>>, vector<4x8x8xbf16>
    "tpu.trace_start"() <{level = 10 : i32, message = "hqd,hkd->hqk"}> : () -> ()
    %cst_60 = arith.constant dense<0.000000e+00> : vector<4x8x8xf32>
    %159 = tpu.matmul %157, %158, %cst_60 {dimension_numbers = #tpu.dot_dimension_numbers<[2], [2], [1], [1], [0, 0, 0, 1, 1, 1], [0], [0]>} : vector<4x8x8xbf16>, vector<4x8x8xbf16>, vector<4x8x8xf32> -> vector<4x8x8xf32>
    "tpu.trace_stop"() : () -> ()
    %cst_61 = arith.constant dense<0xFF800000> : vector<4x8xf32>
    %160 = vector.multi_reduction <maximumf>, %159, %cst_61 [2] : vector<4x8x8xf32> to vector<4x8xf32>
    %161 = vector.shape_cast %160 : vector<4x8xf32> to vector<4x8x1xf32>
    %162 = vector.broadcast %161 : vector<4x8x1xf32> to vector<4x8x8xf32>
    %163 = arith.subf %159, %162 : vector<4x8x8xf32>
    %164 = math.exp %163 : vector<4x8x8xf32>
    %cst_62 = arith.constant dense<0.000000e+00> : vector<4x8xf32>
    %165 = vector.multi_reduction <add>, %164, %cst_62 [2] : vector<4x8x8xf32> to vector<4x8xf32>
    %166 = vector.shape_cast %165 : vector<4x8xf32> to vector<4x8x1xf32>
    %167 = tpu.reciprocal %166 {approx = true} : vector<4x8x1xf32> -> vector<4x8x1xf32>
    %168 = vector.broadcast %167 : vector<4x8x1xf32> to vector<4x8x8xf32>
    %169 = arith.mulf %164, %168 : vector<4x8x8xf32>
    %170 = arith.truncf %169 : vector<4x8x8xf32> to vector<4x8x8xbf16>
    %c0_63 = arith.constant 0 : index
    %c0_64 = arith.constant 0 : index
    %c0_65 = arith.constant 0 : index
    %171 = vector.load %arg19[%c0_63, %c0_64, %c0_65] : memref<4x8x8xbf16, #tpu.memory_space<vmem>>, vector<4x8x8xbf16>
    "tpu.trace_start"() <{level = 10 : i32, message = "hqk,hkd->hqd"}> : () -> ()
    %cst_66 = arith.constant dense<0.000000e+00> : vector<4x8x8xf32>
    %172 = tpu.matmul %170, %171, %cst_66 {dimension_numbers = #tpu.dot_dimension_numbers<[2], [1], [1], [2], [0, 0, 0, 1, 1, 2], [0], [0]>} : vector<4x8x8xbf16>, vector<4x8x8xbf16>, vector<4x8x8xf32> -> vector<4x8x8xf32>
    "tpu.trace_stop"() : () -> ()
    %173 = arith.negf %15 : vector<8x128xf32>
    %174 = math.exp %173 : vector<8x128xf32>
    %cst_67 = arith.constant 1.000000e+00 : f32
    %175 = vector.broadcast %cst_67 : f32 to vector<8x128xf32>
    %176 = arith.addf %175, %174 : vector<8x128xf32>
    %177 = arith.divf %175, %176 : vector<8x128xf32>
    %178 = arith.mulf %15, %177 : vector<8x128xf32>
    %179 = arith.mulf %178, %16 : vector<8x128xf32>
    %180 = arith.truncf %179 : vector<8x128xf32> to vector<8x128xbf16>
    %c0_68 = arith.constant 0 : index
    %c0_69 = arith.constant 0 : index
    %181 = vector.load %arg14[%c0_68, %c0_69] : memref<128x32xbf16, #tpu.memory_space<vmem>>, vector<128x32xbf16>
    %cst_70 = arith.constant dense<0.000000e+00> : vector<8x32xf32>
    %182 = tpu.matmul %180, %181, %cst_70 {dimension_numbers = #tpu.dot_dimension_numbers<[1], [0], [0], [1], [0, 0, 1, 1], [], []>} : vector<8x128xbf16>, vector<128x32xbf16>, vector<8x32xf32> -> vector<8x32xf32>
    %183 = vector.extract_strided_slice %172 {offsets = [0, 0, 0], sizes = [1, 8, 8], strides = [1, 1, 1]} : vector<4x8x8xf32> to vector<1x8x8xf32>
    %184 = vector.shape_cast %183 : vector<1x8x8xf32> to vector<8x8xf32>
    %185 = arith.truncf %184 : vector<8x8xf32> to vector<8x8xbf16>
    %c0_71 = arith.constant 0 : index
    %c0_72 = arith.constant 0 : index
    %c0_73 = arith.constant 0 : index
    %186 = vector.load %arg13[%c0_71, %c0_72, %c0_73] : memref<4x8x32xbf16, #tpu.memory_space<vmem>>, vector<1x8x32xbf16>
    %187 = vector.shape_cast %186 : vector<1x8x32xbf16> to vector<8x32xbf16>
    %cst_74 = arith.constant dense<0.000000e+00> : vector<8x32xf32>
    %188 = tpu.matmul %185, %187, %cst_74 {dimension_numbers = #tpu.dot_dimension_numbers<[1], [0], [0], [1], [0, 0, 1, 1], [], []>} : vector<8x8xbf16>, vector<8x32xbf16>, vector<8x32xf32> -> vector<8x32xf32>
    %189 = arith.addf %182, %188 : vector<8x32xf32>
    %190 = vector.extract_strided_slice %172 {offsets = [1, 0, 0], sizes = [1, 8, 8], strides = [1, 1, 1]} : vector<4x8x8xf32> to vector<1x8x8xf32>
    %191 = vector.shape_cast %190 : vector<1x8x8xf32> to vector<8x8xf32>
    %192 = arith.truncf %191 : vector<8x8xf32> to vector<8x8xbf16>
    %c1_75 = arith.constant 1 : index
    %c0_76 = arith.constant 0 : index
    %c0_77 = arith.constant 0 : index
    %193 = vector.load %arg13[%c1_75, %c0_76, %c0_77] : memref<4x8x32xbf16, #tpu.memory_space<vmem>>, vector<1x8x32xbf16>
    %194 = vector.shape_cast %193 : vector<1x8x32xbf16> to vector<8x32xbf16>
    %cst_78 = arith.constant dense<0.000000e+00> : vector<8x32xf32>
    %195 = tpu.matmul %192, %194, %cst_78 {dimension_numbers = #tpu.dot_dimension_numbers<[1], [0], [0], [1], [0, 0, 1, 1], [], []>} : vector<8x8xbf16>, vector<8x32xbf16>, vector<8x32xf32> -> vector<8x32xf32>
    %196 = arith.addf %189, %195 : vector<8x32xf32>
    %197 = vector.extract_strided_slice %172 {offsets = [2, 0, 0], sizes = [1, 8, 8], strides = [1, 1, 1]} : vector<4x8x8xf32> to vector<1x8x8xf32>
    %198 = vector.shape_cast %197 : vector<1x8x8xf32> to vector<8x8xf32>
    %199 = arith.truncf %198 : vector<8x8xf32> to vector<8x8xbf16>
    %c2_79 = arith.constant 2 : index
    %c0_80 = arith.constant 0 : index
    %c0_81 = arith.constant 0 : index
    %200 = vector.load %arg13[%c2_79, %c0_80, %c0_81] : memref<4x8x32xbf16, #tpu.memory_space<vmem>>, vector<1x8x32xbf16>
    %201 = vector.shape_cast %200 : vector<1x8x32xbf16> to vector<8x32xbf16>
    %cst_82 = arith.constant dense<0.000000e+00> : vector<8x32xf32>
    %202 = tpu.matmul %199, %201, %cst_82 {dimension_numbers = #tpu.dot_dimension_numbers<[1], [0], [0], [1], [0, 0, 1, 1], [], []>} : vector<8x8xbf16>, vector<8x32xbf16>, vector<8x32xf32> -> vector<8x32xf32>
    %203 = arith.addf %196, %202 : vector<8x32xf32>
    %204 = vector.extract_strided_slice %172 {offsets = [3, 0, 0], sizes = [1, 8, 8], strides = [1, 1, 1]} : vector<4x8x8xf32> to vector<1x8x8xf32>
    %205 = vector.shape_cast %204 : vector<1x8x8xf32> to vector<8x8xf32>
    %206 = arith.truncf %205 : vector<8x8xf32> to vector<8x8xbf16>
    %c3_83 = arith.constant 3 : index
    %c0_84 = arith.constant 0 : index
    %c0_85 = arith.constant 0 : index
    %207 = vector.load %arg13[%c3_83, %c0_84, %c0_85] : memref<4x8x32xbf16, #tpu.memory_space<vmem>>, vector<1x8x32xbf16>
    %208 = vector.shape_cast %207 : vector<1x8x32xbf16> to vector<8x32xbf16>
    %cst_86 = arith.constant dense<0.000000e+00> : vector<8x32xf32>
    %209 = tpu.matmul %206, %208, %cst_86 {dimension_numbers = #tpu.dot_dimension_numbers<[1], [0], [0], [1], [0, 0, 1, 1], [], []>} : vector<8x8xbf16>, vector<8x32xbf16>, vector<8x32xf32> -> vector<8x32xf32>
    %210 = arith.addf %203, %209 : vector<8x32xf32>
    %c0_87 = arith.constant 0 : index
    %c0_88 = arith.constant 0 : index
    %211 = vector.load %arg15[%c0_87, %c0_88] : memref<1x32xf32, #tpu.memory_space<vmem>>, vector<1x32xf32>
    %212 = vector.shape_cast %211 : vector<1x32xf32> to vector<32xf32>
    %213 = vector.shape_cast %212 : vector<32xf32> to vector<1x32xf32>
    %214 = vector.broadcast %213 : vector<1x32xf32> to vector<8x32xf32>
    %215 = arith.addf %210, %214 : vector<8x32xf32>
    %c0_89 = arith.constant 0 : index
    %216 = arith.index_cast %4 : i32 to index
    %c0_90 = arith.constant 0 : index
    %217 = vector.load %arg2[%c0_89, %216, %c0_90] : memref<1x8x32xf32, #tpu.memory_space<vmem>>, vector<1x8x32xf32>
    %218 = vector.shape_cast %217 : vector<1x8x32xf32> to vector<8x32xf32>
    %219 = arith.addf %218, %215 : vector<8x32xf32>
    %c0_91 = arith.constant 0 : index
    %c0_92 = arith.constant 0 : index
    %c0_93 = arith.constant 0 : index
    %220 = vector.load %arg16[%c0_91, %c0_92, %c0_93] : memref<1x8x32xf32, #tpu.memory_space<vmem>>, vector<1x8x32xf32>
    %221 = vector.shape_cast %220 : vector<1x8x32xf32> to vector<8x32xf32>
    %222 = vector.shape_cast %219 : vector<8x32xf32> to vector<1x8x32xf32>
    tpu.vector_store %arg16[%c0_91, %c0_92, %c0_93], %222 {strides = array<i32>} : memref<1x8x32xf32, #tpu.memory_space<vmem>>, vector<1x8x32xf32>,
    return
  }
  func.func @transform_0(%arg0: i32, %arg1: i32) -> (i32, i32, i32) {
    %c0_i32 = arith.constant 0 : i32
    %c0_i32_0 = arith.constant 0 : i32
    %c0_i32_1 = arith.constant 0 : i32
    return %arg0, %c0_i32, %c0_i32_0 : i32, i32, i32
  }
  func.func @transform_1(%arg0: i32, %arg1: i32) -> (i32, i32) {
    %c0_i32 = arith.constant 0 : i32
    %c0_i32_0 = arith.constant 0 : i32
    %c0_i32_1 = arith.constant 0 : i32
    return %c0_i32, %c0_i32_0 : i32, i32
  }
  func.func @transform_2(%arg0: i32, %arg1: i32) -> (i32, i32) {
    %c0_i32 = arith.constant 0 : i32
    %c0_i32_0 = arith.constant 0 : i32
    %c0_i32_1 = arith.constant 0 : i32
    return %c0_i32, %c0_i32_0 : i32, i32
  }
  func.func @transform_3(%arg0: i32, %arg1: i32) -> (i32, i32) {
    %c0_i32 = arith.constant 0 : i32
    %c0_i32_0 = arith.constant 0 : i32
    %c0_i32_1 = arith.constant 0 : i32
    return %c0_i32, %c0_i32_0 : i32, i32
  }
  func.func @transform_4(%arg0: i32, %arg1: i32) -> (i32, i32) {
    %c0_i32 = arith.constant 0 : i32
    %c0_i32_0 = arith.constant 0 : i32
    %c0_i32_1 = arith.constant 0 : i32
    return %c0_i32, %c0_i32_0 : i32, i32
  }
  func.func @transform_5(%arg0: i32, %arg1: i32) -> (i32, i32) {
    %c0_i32 = arith.constant 0 : i32
    %c0_i32_0 = arith.constant 0 : i32
    %c0_i32_1 = arith.constant 0 : i32
    return %c0_i32, %c0_i32_0 : i32, i32
  }
  func.func @transform_6(%arg0: i32, %arg1: i32) -> (i32, i32) {
    %c0_i32 = arith.constant 0 : i32
    %c0_i32_0 = arith.constant 0 : i32
    %c0_i32_1 = arith.constant 0 : i32
    return %c0_i32, %c0_i32_0 : i32, i32
  }
  func.func @transform_7(%arg0: i32, %arg1: i32) -> (i32, i32) {
    %c0_i32 = arith.constant 0 : i32
    %c0_i32_0 = arith.constant 0 : i32
    %c0_i32_1 = arith.constant 0 : i32
    return %c0_i32, %c0_i32_0 : i32, i32
  }
  func.func @transform_8(%arg0: i32, %arg1: i32) -> (i32, i32) {
    %c0_i32 = arith.constant 0 : i32
    %c0_i32_0 = arith.constant 0 : i32
    %c0_i32_1 = arith.constant 0 : i32
    return %c0_i32, %c0_i32_0 : i32, i32
  }
  func.func @transform_9(%arg0: i32, %arg1: i32) -> (i32, i32) {
    %c0_i32 = arith.constant 0 : i32
    %c0_i32_0 = arith.constant 0 : i32
    %c0_i32_1 = arith.constant 0 : i32
    return %c0_i32, %c0_i32_0 : i32, i32
  }
  func.func @transform_10(%arg0: i32, %arg1: i32) -> (i32, i32) {
    %c0_i32 = arith.constant 0 : i32
    %c0_i32_0 = arith.constant 0 : i32
    %c0_i32_1 = arith.constant 0 : i32
    return %c0_i32, %c0_i32_0 : i32, i32
  }
  func.func @transform_11(%arg0: i32, %arg1: i32) -> (i32, i32, i32) {
    %c0_i32 = arith.constant 0 : i32
    %c0_i32_0 = arith.constant 0 : i32
    %c0_i32_1 = arith.constant 0 : i32
    %c0_i32_2 = arith.constant 0 : i32
    return %c0_i32, %c0_i32_0, %c0_i32_1 : i32, i32, i32
  }
  func.func @transform_12(%arg0: i32, %arg1: i32) -> (i32, i32) {
    %c0_i32 = arith.constant 0 : i32
    %c0_i32_0 = arith.constant 0 : i32
    %c0_i32_1 = arith.constant 0 : i32
    return %c0_i32, %c0_i32_0 : i32, i32
  }
  func.func @transform_13(%arg0: i32, %arg1: i32) -> (i32, i32) {
    %c0_i32 = arith.constant 0 : i32
    %c0_i32_0 = arith.constant 0 : i32
    %c0_i32_1 = arith.constant 0 : i32
    return %c0_i32, %c0_i32_0 : i32, i32
  }
  func.func @transform_14(%arg0: i32, %arg1: i32) -> (i32, i32, i32) {
    %c0_i32 = arith.constant 0 : i32
    %c0_i32_0 = arith.constant 0 : i32
    return %arg0, %arg1, %c0_i32 : i32, i32, i32
  }
}

</mosaic_0001>

<llo_original>
// kernel: tpu_custom_call.1
$region0: #{tpu_custom_call.1}
  #allocation0 [shape = 'u32[]', space=smem, size = 0x4, offset = 0x4, fixed_abs, tag = 'smem constant byte address 0x4 - core index']
  #allocation1 [shape = 'u32[144,128]{1,0:T(1,128)}', space=vmem, size = 0x12000, scoped, tag = 'internal scratch']
  #allocation2 [shape = 'bf16[8,32]{1,0:T(8,128)(2,1)}', space=vmem, size = 0x800, scoped, tag = 'scratch operand']
  #allocation3 [shape = 'bf16[4,8,8]{2,1,0:T(8,128)(2,1)}', space=vmem, size = 0x2000, scoped, tag = 'scratch operand']
  #allocation4 [shape = 'bf16[4,8,8]{2,1,0:T(8,128)(2,1)}', space=vmem, size = 0x2000, scoped, tag = 'scratch operand']
  #allocation5 [shape = 'bf16[4,8,8]{2,1,0:T(8,128)(2,1)}', space=vmem, size = 0x2000, scoped, tag = 'scratch operand']
  %s0 = inlined_call_operand.vmem [shape: f32[2,8,32], index: 0, kind: input, shape index: {}]
  %s1 = inlined_call_operand.vmem [shape: f32[1,32], index: 1, kind: input, shape index: {}]
  %s2 = inlined_call_operand.vmem [shape: f32[1,32], index: 2, kind: input, shape index: {}]
  %s3 = inlined_call_operand.vmem [shape: bf16[32,64], index: 3, kind: input, shape index: {}]
  %s4 = inlined_call_operand.hbm [shape: f32[1,64], index: 4, kind: input, shape index: {}]
  %s5 = inlined_call_operand.vmem [shape: bf16[32,288], index: 5, kind: input, shape index: {}]
  %s6 = inlined_call_operand.hbm [shape: f32[1,288], index: 6, kind: input, shape index: {}]
  %s7 = inlined_call_operand.hbm [shape: f32[1,8], index: 7, kind: input, shape index: {}]
  %s8 = inlined_call_operand.hbm [shape: f32[1,8], index: 8, kind: input, shape index: {}]
  %s9 = inlined_call_operand.hbm [shape: f32[1,8], index: 9, kind: input, shape index: {}]
  %s10 = inlined_call_operand.vmem [shape: f32[1,8], index: 10, kind: input, shape index: {}]
  %s11 = inlined_call_operand.vmem [shape: bf16[4,8,32], index: 11, kind: input, shape index: {}]
  %s12 = inlined_call_operand.vmem [shape: bf16[128,32], index: 12, kind: input, shape index: {}]
  %s13 = inlined_call_operand.vmem [shape: f32[1,32], index: 13, kind: input, shape index: {}]
  %s14 = inlined_call_operand.hbm [shape: f32[2,8,32], index: 14, kind: output, shape index: {}]
  %s15 = sld [smem:[#allocation0]]
  $region113: #{tpu_custom_call.1} parent=0
    _
  %s17 = ssub.s32 1, %s15
  %s18 = scalar_select 0, %s17, %s15
  $region1: #{tpu_custom_call.1} parent=0
    #allocation6 [shape = 'u8[512]{0}', space=vmem, size = 0x400, scoped, tag = 'input window, operand 4, single buffered']
    #allocation7 [shape = 's32[2]{0}', space=sflag, size = 0x8, scoped, tag = 'scoped memory for tpu_custom_call.1']
    #allocation8 [shape = 's32[2]{0}', space=sflag, size = 0x8, scoped, tag = 'scoped memory for tpu_custom_call.1']
    #allocation9 [shape = 'u8[1536]{0}', space=vmem, size = 0x800, scoped, tag = 'input window, operand 6, single buffered']
    #allocation10 [shape = 's32[1]{0}', space=sflag, size = 0x4, scoped, tag = 'scoped memory for tpu_custom_call.1']
    #allocation11 [shape = 'u8[512]{0}', space=vmem, size = 0x400, scoped, tag = 'input window, operand 7, single buffered']
    #allocation12 [shape = 'u8[512]{0}', space=vmem, size = 0x400, scoped, tag = 'input window, operand 8, single buffered']
    #allocation13 [shape = 's32[1]{0}', space=sflag, size = 0x4, scoped, tag = 'scoped memory for tpu_custom_call.1']
    #allocation14 [shape = 'u8[512]{0}', space=vmem, size = 0x400, scoped, tag = 'input window, operand 9, single buffered']
    #allocation15 [shape = 'u8[8192]{0}', space=vmem, size = 0x2000, scoped, tag = 'output window, operand 0']
    %19 = vsyncpa [#allocation7], 0
    %20 = vsyncpa [#allocation10], 0
    %21 = vsyncpa [#allocation13], 0
    %22 = vsyncpa [#allocation8], 0
    %s23 = scalar_lea.sflag [#allocation8], 1
    %24 = vsyncpa %s23, 0
    loop: start=0, step=1, limit=4
    $region2: #{tpu_custom_call.1} parent=1 // loop_pre_header
      _
    $region3: #{tpu_custom_call.1} parent=1 // loop_header
      %s26 = sphi 0, %s30
      %p27 = scmp.ge.s32.totalorder %s26, 4
      %s33 = sphi 0, %s45
      %s34 = sphi 0, %s41
      %s35 = sphi 0, %s33
      %s36 = sphi 0, %s34
      %s37 = sphi 0, %s35
      %s38 = sphi 0, %s36
      %s48 = sphi 0, %s50
      %s51 = sphi 0, %s48
      %s52 = sphi 0, %s51
      %s68 = sphi 0, %s52
      %s72 = sphi 0, %s72
      %s74 = sphi 0, %s72
      %s75 = sphi 0, %s74
      %s89 = sphi 0, %s75
      %s93 = sphi 0, %s93
      %s95 = sphi 0, %s93
      %s96 = sphi 0, %s95
      %s110 = sphi 0, %s96
      %s114 = sphi 0, %s114
      %s116 = sphi 0, %s114
      %s117 = sphi 0, %s116
      %s131 = sphi 0, %s117
      %s135 = sphi 0, %s135
      %s137 = sphi 0, %s135
      %s138 = sphi 0, %s137
      %s152 = sphi 0, %s138
      %s156 = sphi 0, %s156
      %s158 = sphi 0, %s156
      %s159 = sphi 0, %s158
      %s173 = sphi 0, %s159
      %s177 = sphi 0, %s177
      %s179 = sphi 0, %s177
      %s180 = sphi 0, %s179
      %s194 = sphi 0, %s180
      %s198 = sphi 0, %s198
      %s200 = sphi 0, %s198
      %s201 = sphi 0, %s200
      %s215 = sphi 0, %s201
      %s219 = sphi 0, %s219
      %s221 = sphi 0, %s219
      %s222 = sphi 0, %s221
      %s236 = sphi 0, %s222
      %s240 = sphi 0, %s240
      %s242 = sphi 0, %s240
      %s243 = sphi 0, %s242
      %s257 = sphi 0, %s243
      %s261 = sphi 0, %s261
      %s263 = sphi 0, %s261
      %s264 = sphi 0, %s263
      %s278 = sphi 0, %s264
      %s282 = sphi 0, %s282
      %s284 = sphi 0, %s282
      %s285 = sphi 0, %s284
      %s299 = sphi 0, %s285
      %s303 = sphi 0, %s303
      %s305 = sphi 0, %s303
      %s306 = sphi 0, %s305
      %s320 = sphi 0, %s306
      %s324 = sphi 0, %s324
      %s326 = sphi 0, %s324
      %s327 = sphi 0, %s326
      %s341 = sphi 0, %s327
      %s349 = sphi 0, %s351
      %s352 = sphi 0, %s349
      %s353 = sphi 0, %s352
      %s369 = sphi 0, %s353
    $region4: #{tpu_custom_call.1} parent=1 // loop_header_branch
      %29 = sbr.rel (%p27) target = $region8
    $region5: #{tpu_custom_call.1} parent=1 // loop_body
      %s31 = ssub.s32 %s26, 1
      %s32 = ssub.s32 %s26, 2
      %s39 = sadd.s32 1, %s34
      %p40 = scmp.ge.s32.totalorder %s39, 1
      %s41 = scalar_select %p40, 0, %s39
      %s42 = sadd.s32 1, %s33
      %s43 = scalar_select %p40, %s42, %s33
      %p44 = scmp.ge.s32.totalorder %s43, 2
      %s45 = scalar_select %p44, 0, %s43
      %s46 = ssub.s32 %s33, %s45
      %p47 = scmp.eq.s32.totalorder %s46, 0
      %s49 = sadd.s32 %s48, 1
      %s50 = scalar_select %p47, %s48, %s49
      %p53 = pneg %p47
      %p54 = scmp.eq.s32.totalorder %s26, 1
      %p55 = por %p53, %p54
      %p56 = scmp.ne.s32.totalorder %s48, %s51
      %p57 = scmp.eq.s32.totalorder %s26, 0
      %p58 = por %p56, %p57
      %p59 = scmp.ne.s32.totalorder %s48, %s51
      %p60 = scmp.eq.s32.totalorder %s31, 1
      %p61 = por %p59, %p60
      %p62 = scmp.ne.s32.totalorder %s51, %s52
      %p63 = scmp.eq.s32.totalorder %s31, 0
      %p64 = por %p62, %p63
      %p65 = scmp.ne.s32.totalorder %s51, %s52
      %p66 = scmp.eq.s32.totalorder %s32, 1
      %p67 = por %p65, %p66
      %p69 = scmp.ne.s32.totalorder %s52, %s68
      %p70 = scmp.eq.s32.totalorder %s32, 0
      %p71 = por %p69, %p70
      %s73 = sadd.s32 %s72, 1
      %p76 = scmp.eq.s32.totalorder %s26, 1
      %p77 = scmp.ne.s32.totalorder %s72, %s74
      %p78 = scmp.eq.s32.totalorder %s26, 0
      %p79 = por %p77, %p78
      %p80 = scmp.ne.s32.totalorder %s72, %s74
      %p81 = scmp.eq.s32.totalorder %s31, 1
      %p82 = por %p80, %p81
      %p83 = scmp.ne.s32.totalorder %s74, %s75
      %p84 = scmp.eq.s32.totalorder %s31, 0
      %p85 = por %p83, %p84
      %p86 = scmp.ne.s32.totalorder %s74, %s75
      %p87 = scmp.eq.s32.totalorder %s32, 1
      %p88 = por %p86, %p87
      %p90 = scmp.ne.s32.totalorder %s75, %s89
      %p91 = scmp.eq.s32.totalorder %s32, 0
      %p92 = por %p90, %p91
      %s94 = sadd.s32 %s93, 1
      %p97 = scmp.eq.s32.totalorder %s26, 1
      %p98 = scmp.ne.s32.totalorder %s93, %s95
      %p99 = scmp.eq.s32.totalorder %s26, 0
      %p100 = por %p98, %p99
      %p101 = scmp.ne.s32.totalorder %s93, %s95
      %p102 = scmp.eq.s32.totalorder %s31, 1
      %p103 = por %p101, %p102
      %p104 = scmp.ne.s32.totalorder %s95, %s96
      %p105 = scmp.eq.s32.totalorder %s31, 0
      %p106 = por %p104, %p105
      %p107 = scmp.ne.s32.totalorder %s95, %s96
      %p108 = scmp.eq.s32.totalorder %s32, 1
      %p109 = por %p107, %p108
      %p111 = scmp.ne.s32.totalorder %s96, %s110
      %p112 = scmp.eq.s32.totalorder %s32, 0
      %p113 = por %p111, %p112
      %s115 = sadd.s32 %s114, 1
      %p118 = scmp.eq.s32.totalorder %s26, 1
      %p119 = scmp.ne.s32.totalorder %s114, %s116
      %p120 = scmp.eq.s32.totalorder %s26, 0
      %p121 = por %p119, %p120
      %p122 = scmp.ne.s32.totalorder %s114, %s116
      %p123 = scmp.eq.s32.totalorder %s31, 1
      %p124 = por %p122, %p123
      %p125 = scmp.ne.s32.totalorder %s116, %s117
      %p126 = scmp.eq.s32.totalorder %s31, 0
      %p127 = por %p125, %p126
      %p128 = scmp.ne.s32.totalorder %s116, %s117
      %p129 = scmp.eq.s32.totalorder %s32, 1
      %p130 = por %p128, %p129
      %p132 = scmp.ne.s32.totalorder %s117, %s131
      %p133 = scmp.eq.s32.totalorder %s32, 0
      %p134 = por %p132, %p133
      %s136 = sadd.s32 %s135, 1
      %p139 = scmp.eq.s32.totalorder %s26, 1
      %p140 = scmp.ne.s32.totalorder %s135, %s137
      %p141 = scmp.eq.s32.totalorder %s26, 0
      %p142 = por %p140, %p141
      %p143 = scmp.ne.s32.totalorder %s135, %s137
      %p144 = scmp.eq.s32.totalorder %s31, 1
      %p145 = por %p143, %p144
      %p146 = scmp.ne.s32.totalorder %s137, %s138
      %p147 = scmp.eq.s32.totalorder %s31, 0
      %p148 = por %p146, %p147
      %p149 = scmp.ne.s32.totalorder %s137, %s138
      %p150 = scmp.eq.s32.totalorder %s32, 1
      %p151 = por %p149, %p150
      %p153 = scmp.ne.s32.totalorder %s138, %s152
      %p154 = scmp.eq.s32.totalorder %s32, 0
      %p155 = por %p153, %p154
      %s157 = sadd.s32 %s156, 1
      %p160 = scmp.eq.s32.totalorder %s26, 1
      %p161 = scmp.ne.s32.totalorder %s156, %s158
      %p162 = scmp.eq.s32.totalorder %s26, 0
      %p163 = por %p161, %p162
      %p164 = scmp.ne.s32.totalorder %s156, %s158
      %p165 = scmp.eq.s32.totalorder %s31, 1
      %p166 = por %p164, %p165
      %p167 = scmp.ne.s32.totalorder %s158, %s159
      %p168 = scmp.eq.s32.totalorder %s31, 0
      %p169 = por %p167, %p168
      %p170 = scmp.ne.s32.totalorder %s158, %s159
      %p171 = scmp.eq.s32.totalorder %s32, 1
      %p172 = por %p170, %p171
      %p174 = scmp.ne.s32.totalorder %s159, %s173
      %p175 = scmp.eq.s32.totalorder %s32, 0
      %p176 = por %p174, %p175
      %s178 = sadd.s32 %s177, 1
      %p181 = scmp.eq.s32.totalorder %s26, 1
      %p182 = scmp.ne.s32.totalorder %s177, %s179
      %p183 = scmp.eq.s32.totalorder %s26, 0
      %p184 = por %p182, %p183
      %p185 = scmp.ne.s32.totalorder %s177, %s179
      %p186 = scmp.eq.s32.totalorder %s31, 1
      %p187 = por %p185, %p186
      %p188 = scmp.ne.s32.totalorder %s179, %s180
      %p189 = scmp.eq.s32.totalorder %s31, 0
      %p190 = por %p188, %p189
      %p191 = scmp.ne.s32.totalorder %s179, %s180
      %p192 = scmp.eq.s32.totalorder %s32, 1
      %p193 = por %p191, %p192
      %p195 = scmp.ne.s32.totalorder %s180, %s194
      %p196 = scmp.eq.s32.totalorder %s32, 0
      %p197 = por %p195, %p196
      %s199 = sadd.s32 %s198, 1
      %p202 = scmp.eq.s32.totalorder %s26, 1
      %p203 = scmp.ne.s32.totalorder %s198, %s200
      %p204 = scmp.eq.s32.totalorder %s26, 0
      %p205 = por %p203, %p204
      %p206 = scmp.ne.s32.totalorder %s198, %s200
      %p207 = scmp.eq.s32.totalorder %s31, 1
      %p208 = por %p206, %p207
      %p209 = scmp.ne.s32.totalorder %s200, %s201
      %p210 = scmp.eq.s32.totalorder %s31, 0
      %p211 = por %p209, %p210
      %p212 = scmp.ne.s32.totalorder %s200, %s201
      %p213 = scmp.eq.s32.totalorder %s32, 1
      %p214 = por %p212, %p213
      %p216 = scmp.ne.s32.totalorder %s201, %s215
      %p217 = scmp.eq.s32.totalorder %s32, 0
      %p218 = por %p216, %p217
      %s220 = sadd.s32 %s219, 1
      %p223 = scmp.eq.s32.totalorder %s26, 1
      %p224 = scmp.ne.s32.totalorder %s219, %s221
      %p225 = scmp.eq.s32.totalorder %s26, 0
      %p226 = por %p224, %p225
      %p227 = scmp.ne.s32.totalorder %s219, %s221
      %p228 = scmp.eq.s32.totalorder %s31, 1
      %p229 = por %p227, %p228
      %p230 = scmp.ne.s32.totalorder %s221, %s222
      %p231 = scmp.eq.s32.totalorder %s31, 0
      %p232 = por %p230, %p231
      %p233 = scmp.ne.s32.totalorder %s221, %s222
      %p234 = scmp.eq.s32.totalorder %s32, 1
      %p235 = por %p233, %p234
      %p237 = scmp.ne.s32.totalorder %s222, %s236
      %p238 = scmp.eq.s32.totalorder %s32, 0
      %p239 = por %p237, %p238
      %s241 = sadd.s32 %s240, 1
      %p244 = scmp.eq.s32.totalorder %s26, 1
      %p245 = scmp.ne.s32.totalorder %s240, %s242
      %p246 = scmp.eq.s32.totalorder %s26, 0
      %p247 = por %p245, %p246
      %p248 = scmp.ne.s32.totalorder %s240, %s242
      %p249 = scmp.eq.s32.totalorder %s31, 1
      %p250 = por %p248, %p249
      %p251 = scmp.ne.s32.totalorder %s242, %s243
      %p252 = scmp.eq.s32.totalorder %s31, 0
      %p253 = por %p251, %p252
      %p254 = scmp.ne.s32.totalorder %s242, %s243
      %p255 = scmp.eq.s32.totalorder %s32, 1
      %p256 = por %p254, %p255
      %p258 = scmp.ne.s32.totalorder %s243, %s257
      %p259 = scmp.eq.s32.totalorder %s32, 0
      %p260 = por %p258, %p259
      %s262 = sadd.s32 %s261, 1
      %p265 = scmp.eq.s32.totalorder %s26, 1
      %p266 = scmp.ne.s32.totalorder %s261, %s263
      %p267 = scmp.eq.s32.totalorder %s26, 0
      %p268 = por %p266, %p267
      %p269 = scmp.ne.s32.totalorder %s261, %s263
      %p270 = scmp.eq.s32.totalorder %s31, 1
      %p271 = por %p269, %p270
      %p272 = scmp.ne.s32.totalorder %s263, %s264
      %p273 = scmp.eq.s32.totalorder %s31, 0
      %p274 = por %p272, %p273
      %p275 = scmp.ne.s32.totalorder %s263, %s264
      %p276 = scmp.eq.s32.totalorder %s32, 1
      %p277 = por %p275, %p276
      %p279 = scmp.ne.s32.totalorder %s264, %s278
      %p280 = scmp.eq.s32.totalorder %s32, 0
      %p281 = por %p279, %p280
      %s283 = sadd.s32 %s282, 1
      %p286 = scmp.eq.s32.totalorder %s26, 1
      %p287 = scmp.ne.s32.totalorder %s282, %s284
      %p288 = scmp.eq.s32.totalorder %s26, 0
      %p289 = por %p287, %p288
      %p290 = scmp.ne.s32.totalorder %s282, %s284
      %p291 = scmp.eq.s32.totalorder %s31, 1
      %p292 = por %p290, %p291
      %p293 = scmp.ne.s32.totalorder %s284, %s285
      %p294 = scmp.eq.s32.totalorder %s31, 0
      %p295 = por %p293, %p294
      %p296 = scmp.ne.s32.totalorder %s284, %s285
      %p297 = scmp.eq.s32.totalorder %s32, 1
      %p298 = por %p296, %p297
      %p300 = scmp.ne.s32.totalorder %s285, %s299
      %p301 = scmp.eq.s32.totalorder %s32, 0
      %p302 = por %p300, %p301
      %s304 = sadd.s32 %s303, 1
      %p307 = scmp.eq.s32.totalorder %s26, 1
      %p308 = scmp.ne.s32.totalorder %s303, %s305
      %p309 = scmp.eq.s32.totalorder %s26, 0
      %p310 = por %p308, %p309
      %p311 = scmp.ne.s32.totalorder %s303, %s305
      %p312 = scmp.eq.s32.totalorder %s31, 1
      %p313 = por %p311, %p312
      %p314 = scmp.ne.s32.totalorder %s305, %s306
      %p315 = scmp.eq.s32.totalorder %s31, 0
      %p316 = por %p314, %p315
      %p317 = scmp.ne.s32.totalorder %s305, %s306
      %p318 = scmp.eq.s32.totalorder %s32, 1
      %p319 = por %p317, %p318
      %p321 = scmp.ne.s32.totalorder %s306, %s320
      %p322 = scmp.eq.s32.totalorder %s32, 0
      %p323 = por %p321, %p322
      %s325 = sadd.s32 %s324, 1
      %p328 = scmp.eq.s32.totalorder %s26, 1
      %p329 = scmp.ne.s32.totalorder %s324, %s326
      %p330 = scmp.eq.s32.totalorder %s26, 0
      %p331 = por %p329, %p330
      %p332 = scmp.ne.s32.totalorder %s324, %s326
      %p333 = scmp.eq.s32.totalorder %s31, 1
      %p334 = por %p332, %p333
      %p335 = scmp.ne.s32.totalorder %s326, %s327
      %p336 = scmp.eq.s32.totalorder %s31, 0
      %p337 = por %p335, %p336
      %p338 = scmp.ne.s32.totalorder %s326, %s327
      %p339 = scmp.eq.s32.totalorder %s32, 1
      %p340 = por %p338, %p339
      %p342 = scmp.ne.s32.totalorder %s327, %s341
      %p343 = scmp.eq.s32.totalorder %s32, 0
      %p344 = por %p342, %p343
      %s345 = ssub.s32 %s33, %s45
      %s346 = ssub.s32 %s34, %s41
      %s347 = sor.u32 %s345, %s346
      %p348 = scmp.eq.s32.totalorder %s347, 0
      %s350 = sadd.s32 %s349, 1
      %s351 = scalar_select %p348, %s349, %s350
      %p354 = pneg %p348
      %p355 = scmp.eq.s32.totalorder %s26, 1
      %p356 = por %p354, %p355
      %p357 = scmp.ne.s32.totalorder %s349, %s352
      %p358 = scmp.eq.s32.totalorder %s26, 0
      %p359 = por %p357, %p358
      %p360 = scmp.ne.s32.totalorder %s349, %s352
      %p361 = scmp.eq.s32.totalorder %s31, 1
      %p362 = por %p360, %p361
      %p363 = scmp.ne.s32.totalorder %s352, %s353
      %p364 = scmp.eq.s32.totalorder %s31, 0
      %p365 = por %p363, %p364
      %p366 = scmp.ne.s32.totalorder %s352, %s353
      %p367 = scmp.eq.s32.totalorder %s32, 1
      %p368 = por %p366, %p367
      %p370 = scmp.ne.s32.totalorder %s353, %s369
      %p371 = scmp.eq.s32.totalorder %s32, 0
      %p372 = por %p370, %p371
      %p373 = scmp.le.s32.totalorder 1, %s26
      %p374 = scmp.lt.s32.totalorder %s26, 3
      %p375 = pnand %p373, %p374
      %p376 = pneg %p375
      // Predicated region
      $region9: #{tpu_custom_call.1} parent=5 // pred_check
        _
      $region10: #{tpu_custom_call.1} parent=5 // pred_check_branch
        %378 = sbr.rel (%p375) target = $region12
      $region11: #{tpu_custom_call.1} parent=5 // pred_region
        %s379 = ssub.s32 %s26, 1
        // Predicated region
        $region13: #{tpu_custom_call.1} parent=11 // pred_check
          %p380 = pneg %p85
        $region14: #{tpu_custom_call.1} parent=11 // pred_check_branch
          %382 = sbr.rel (%p380) target = $region16
        $region15: #{tpu_custom_call.1} parent=11 // pred_region
          _
        $region16: #{tpu_custom_call.1} parent=11 // pred_fallthru
          _
        // Predicated region
        $region17: #{tpu_custom_call.1} parent=11 // pred_check
          %p383 = pneg %p106
        $region18: #{tpu_custom_call.1} parent=11 // pred_check_branch
          %385 = sbr.rel (%p383) target = $region20
        $region19: #{tpu_custom_call.1} parent=11 // pred_region
          _
        $region20: #{tpu_custom_call.1} parent=11 // pred_fallthru
          _
        // Predicated region
        $region21: #{tpu_custom_call.1} parent=11 // pred_check
          %p386 = pneg %p127
        $region22: #{tpu_custom_call.1} parent=11 // pred_check_branch
          %388 = sbr.rel (%p386) target = $region24
        $region23: #{tpu_custom_call.1} parent=11 // pred_region
          _
        $region24: #{tpu_custom_call.1} parent=11 // pred_fallthru
          _
        // Predicated region
        $region25: #{tpu_custom_call.1} parent=11 // pred_check
          %p389 = pneg %p148
        $region26: #{tpu_custom_call.1} parent=11 // pred_check_branch
          %391 = sbr.rel (%p389) target = $region28
        $region27: #{tpu_custom_call.1} parent=11 // pred_region
          %s393 = ssub.s32 16, 16
          %394 = vsyncadd [#allocation7], %s393
          %s396 = sshll.u32 [#allocation6], 4
          %s397 = int_to_ptr.vmem [resolvable:$true] %s396
          %399 = dma.hbm_to_vmem [thread:$0]  %s4, 16, %s397, [#allocation7]
        $region28: #{tpu_custom_call.1} parent=11 // pred_fallthru
          _
        // Predicated region
        $region29: #{tpu_custom_call.1} parent=11 // pred_check
          %p400 = pneg %p169
        $region30: #{tpu_custom_call.1} parent=11 // pred_check_branch
          %402 = sbr.rel (%p400) target = $region32
        $region31: #{tpu_custom_call.1} parent=11 // pred_region
          _
        $region32: #{tpu_custom_call.1} parent=11 // pred_fallthru
          _
        // Predicated region
        $region33: #{tpu_custom_call.1} parent=11 // pred_check
          %p403 = pneg %p190
        $region34: #{tpu_custom_call.1} parent=11 // pred_check_branch
          %405 = sbr.rel (%p403) target = $region36
        $region35: #{tpu_custom_call.1} parent=11 // pred_region
          %s407 = ssub.s32 48, 48
          %408 = vsyncadd [#allocation10], %s407
          %s410 = sshll.u32 [#allocation9], 4
          %s411 = int_to_ptr.vmem [resolvable:$true] %s410
          %413 = dma.hbm_to_vmem [thread:$0]  %s6, 48, %s411, [#allocation10]
        $region36: #{tpu_custom_call.1} parent=11 // pred_fallthru
          _
        // Predicated region
        $region37: #{tpu_custom_call.1} parent=11 // pred_check
          %p414 = pneg %p211
        $region38: #{tpu_custom_call.1} parent=11 // pred_check_branch
          %416 = sbr.rel (%p414) target = $region40
        $region39: #{tpu_custom_call.1} parent=11 // pred_region
          %s418 = ssub.s32 16, 16
          %419 = vsyncadd [#allocation10], %s418
          %s421 = sshll.u32 [#allocation11], 4
          %s422 = int_to_ptr.vmem [resolvable:$true] %s421
          %424 = dma.hbm_to_vmem [thread:$0]  %s7, 16, %s422, [#allocation10]
        $region40: #{tpu_custom_call.1} parent=11 // pred_fallthru
          _
        // Predicated region
        $region41: #{tpu_custom_call.1} parent=11 // pred_check
          %p425 = pneg %p232
        $region42: #{tpu_custom_call.1} parent=11 // pred_check_branch
          %427 = sbr.rel (%p425) target = $region44
        $region43: #{tpu_custom_call.1} parent=11 // pred_region
          %s429 = ssub.s32 16, 16
          %430 = vsyncadd [#allocation13], %s429
          %s432 = sshll.u32 [#allocation12], 4
          %s433 = int_to_ptr.vmem [resolvable:$true] %s432
          %435 = dma.hbm_to_vmem [thread:$0]  %s8, 16, %s433, [#allocation13]
        $region44: #{tpu_custom_call.1} parent=11 // pred_fallthru
          _
        // Predicated region
        $region45: #{tpu_custom_call.1} parent=11 // pred_check
          %p436 = pneg %p253
        $region46: #{tpu_custom_call.1} parent=11 // pred_check_branch
          %438 = sbr.rel (%p436) target = $region48
        $region47: #{tpu_custom_call.1} parent=11 // pred_region
          %s440 = ssub.s32 16, 16
          %441 = vsyncadd [#allocation13], %s440
          %s443 = sshll.u32 [#allocation14], 4
          %s444 = int_to_ptr.vmem [resolvable:$true] %s443
          %446 = dma.hbm_to_vmem [thread:$0]  %s9, 16, %s444, [#allocation13]
        $region48: #{tpu_custom_call.1} parent=11 // pred_fallthru
          _
        // Predicated region
        $region49: #{tpu_custom_call.1} parent=11 // pred_check
          %p447 = pneg %p274
        $region50: #{tpu_custom_call.1} parent=11 // pred_check_branch
          %449 = sbr.rel (%p447) target = $region52
        $region51: #{tpu_custom_call.1} parent=11 // pred_region
          _
        $region52: #{tpu_custom_call.1} parent=11 // pred_fallthru
          _
        // Predicated region
        $region53: #{tpu_custom_call.1} parent=11 // pred_check
          %p450 = pneg %p295
        $region54: #{tpu_custom_call.1} parent=11 // pred_check_branch
          %452 = sbr.rel (%p450) target = $region56
        $region55: #{tpu_custom_call.1} parent=11 // pred_region
          _
        $region56: #{tpu_custom_call.1} parent=11 // pred_fallthru
          _
        // Predicated region
        $region57: #{tpu_custom_call.1} parent=11 // pred_check
          %p453 = pneg %p316
        $region58: #{tpu_custom_call.1} parent=11 // pred_check_branch
          %455 = sbr.rel (%p453) target = $region60
        $region59: #{tpu_custom_call.1} parent=11 // pred_region
          _
        $region60: #{tpu_custom_call.1} parent=11 // pred_fallthru
          _
        // Predicated region
        $region61: #{tpu_custom_call.1} parent=11 // pred_check
          %p456 = pneg %p337
        $region62: #{tpu_custom_call.1} parent=11 // pred_check_branch
          %458 = sbr.rel (%p456) target = $region64
        $region63: #{tpu_custom_call.1} parent=11 // pred_region
          _
        $region64: #{tpu_custom_call.1} parent=11 // pred_fallthru
          _
      $region12: #{tpu_custom_call.1} parent=5 // pred_fallthru
        _
      %p459 = scmp.lt.s32.totalorder %s26, 2
      // Predicated region
      $region65: #{tpu_custom_call.1} parent=5 // pred_check
        %p460 = pneg %p459
      $region66: #{tpu_custom_call.1} parent=5 // pred_check_branch
        %462 = sbr.rel (%p460) target = $region68
      $region67: #{tpu_custom_call.1} parent=5 // pred_region
        // Predicated region
        $region69: #{tpu_custom_call.1} parent=67 // pred_check
          %p463 = pneg %p58
        $region70: #{tpu_custom_call.1} parent=67 // pred_check_branch
          %465 = sbr.rel (%p463) target = $region72
        $region71: #{tpu_custom_call.1} parent=67 // pred_region
          %p466 = scmp.lt.s32.totalorder %s33, 1
          %s467 = scalar_select %p466, %s33, 1
          %s468 = smul.addr %s467, 8
          %s469 = scalar_lea.vmem %s0, %s468
        $region72: #{tpu_custom_call.1} parent=67 // pred_fallthru
          _
      $region68: #{tpu_custom_call.1} parent=5 // pred_fallthru
        _
      %p470 = scmp.le.s32.totalorder 1, %s26
      %p471 = scmp.lt.s32.totalorder %s26, 3
      %p472 = pnand %p470, %p471
      %p473 = pneg %p472
      // Predicated region
      $region73: #{tpu_custom_call.1} parent=5 // pred_check
        _
      $region74: #{tpu_custom_call.1} parent=5 // pred_check_branch
        %475 = sbr.rel (%p472) target = $region76
      $region75: #{tpu_custom_call.1} parent=5 // pred_region
        %s476 = ssub.s32 %s26, 1
        // Predicated region
        $region77: #{tpu_custom_call.1} parent=75 // pred_check
          %p477 = pneg %p148
        $region78: #{tpu_custom_call.1} parent=75 // pred_check_branch
          %479 = sbr.rel (%p477) target = $region80
        $region79: #{tpu_custom_call.1} parent=75 // pred_region
          %480 = dma.done [#allocation7], 16
        $region80: #{tpu_custom_call.1} parent=75 // pred_fallthru
          _
        // Predicated region
        $region81: #{tpu_custom_call.1} parent=75 // pred_check
          %p481 = pneg %p190
        $region82: #{tpu_custom_call.1} parent=75 // pred_check_branch
          %483 = sbr.rel (%p481) target = $region84
        $region83: #{tpu_custom_call.1} parent=75 // pred_region
          %484 = dma.done [#allocation10], 48
        $region84: #{tpu_custom_call.1} parent=75 // pred_fallthru
          _
        // Predicated region
        $region85: #{tpu_custom_call.1} parent=75 // pred_check
          %p485 = pneg %p211
        $region86: #{tpu_custom_call.1} parent=75 // pred_check_branch
          %487 = sbr.rel (%p485) target = $region88
        $region87: #{tpu_custom_call.1} parent=75 // pred_region
          %488 = dma.done [#allocation10], 16
        $region88: #{tpu_custom_call.1} parent=75 // pred_fallthru
          _
        // Predicated region
        $region89: #{tpu_custom_call.1} parent=75 // pred_check
          %p489 = pneg %p232
        $region90: #{tpu_custom_call.1} parent=75 // pred_check_branch
          %491 = sbr.rel (%p489) target = $region92
        $region91: #{tpu_custom_call.1} parent=75 // pred_region
          %492 = dma.done [#allocation13], 16
        $region92: #{tpu_custom_call.1} parent=75 // pred_fallthru
          _
        // Predicated region
        $region93: #{tpu_custom_call.1} parent=75 // pred_check
          %p493 = pneg %p253
        $region94: #{tpu_custom_call.1} parent=75 // pred_check_branch
          %495 = sbr.rel (%p493) target = $region96
        $region95: #{tpu_custom_call.1} parent=75 // pred_region
          %496 = dma.done [#allocation13], 16
        $region96: #{tpu_custom_call.1} parent=75 // pred_fallthru
          _
        %p497 = scmp.lt.s32.totalorder %s35, 1
        %s498 = scalar_select %p497, %s35, 1
        %s499 = smul.addr %s498, 8
        %s500 = scalar_lea.vmem %s0, %s499
        %p501 = pneg %p64
        %p502 = pneg %p61
        %p503 = pneg %p85
        %p504 = pneg %p82
        %p505 = pneg %p106
        %p506 = pneg %p103
        %p507 = pneg %p127
        %p508 = pneg %p124
        %p509 = pneg %p148
        %p510 = pneg %p145
        %p511 = pneg %p169
        %p512 = pneg %p166
        %p513 = pneg %p190
        %p514 = pneg %p187
        %p515 = pneg %p211
        %p516 = pneg %p208
        %p517 = pneg %p232
        %p518 = pneg %p229
        %p519 = pneg %p253
        %p520 = pneg %p250
        %p521 = pneg %p274
        %p522 = pneg %p271
        %p523 = pneg %p295
        %p524 = pneg %p292
        %p525 = pneg %p316
        %p526 = pneg %p313
        %p527 = pneg %p337
        %p528 = pneg %p334
        %p529 = pneg %p365
        %p530 = pneg %p362
        %s531 = sand.u32 %s352, 1
        %s532 = scalar_lea.sflag [#allocation8], %s531
        %s533 = sand.u32 %s352, 1
        %s534 = smul.addr %s533, 8
        %s535 = scalar_lea.vmem [#allocation15], %s534
        %p536 = scmp.lt.s32.totalorder %s35, 1
        %s537 = scalar_select %p536, %s35, 1
        %s538 = smul.addr %s537, 8
        %s539 = scalar_lea.vmem %s0, %s538
        %p541 = scmp.eq.s32.totalorder %s36, 0
        // Predicated region
        $region97: #{tpu_custom_call.1} parent=75 // pred_check
          %p542 = pneg %p541
        $region98: #{tpu_custom_call.1} parent=75 // pred_check_branch
          %544 = sbr.rel (%p542) target = $region100
        $region99: #{tpu_custom_call.1} parent=75 // pred_region
          %v545 = vld [vmem:[%s539] sm:$0xff]
          %v546 = vld [vmem:[%s1] sm:$0x1]
          %v547 = vld [vmem:[%s2] sm:$0x1]
          %vm548 = vcmask 261120
          %v549 = vsel %vm548, %v545, 0.0
          %550 = vadd.xlane.f32.xlu0 %v549
          %v551 = vpop.xlane.xlu0 %550
          %v552 = vrcp.pop 32.0
          %v553 = vmul.f32 %v551, %v552
          %v554 = vsub.f32 %v545, %v553
          %v555 = vmul.f32 %v554, %v554
          %v556 = vsel %vm548, %v555, 0.0
          %557 = vadd.xlane.f32.xlu0 %v556
          %v558 = vpop.xlane.xlu0 %557
          %v559 = vmul.f32 %v558, %v552
          %v560 = vadd.f32 %v559, 1e-05
          %v561 = vrsqrt.pop %v560
          %v562 = vmul.f32 %v554, %v561
          %v564 = vlaneseq
          %v565 = vshrl.u32 %v564, 7
          %v566 = vsub.s32 0, %v565
          %v567 = vrot.slane %v546, %v566
          %v569 = vmul.f32 %v562, %v567
          %v571 = vlaneseq
          %v572 = vshrl.u32 %v571, 7
          %v573 = vsub.s32 0, %v572
          %v574 = vrot.slane %v547, %v573
          %v576 = vadd.f32 %v569, %v574
          %v577 = vpack.c.bf16 %v576, %v576
          %vm578 = vcmask 257024
          %579 = vst.msk [vmem:[#allocation2] sm:$0xf] %vm578, %v577
          %v580 = vld [vmem:[%s3] sm:$0xf]
          %v581 = vld [vmem:[%s3 + $0x4] sm:$0xf]
          %v582 = vld [vmem:[%s3 + $0x8] sm:$0xf]
          %v583 = vld [vmem:[%s3 + $0xc] sm:$0xf]
          %v584 = vld [vmem:[#allocation6] sm:$0x1]
          %v586 = vlaneseq
          %v587 = vshrl.u32 %v586, 7
          %v588 = vsub.s32 0, %v587
          %v589 = vrot.slane %v584, %v588
          %v595 = vunpack.c.l.b16 %v580
          %v596 = vunpack.c.l.b16 %v581
          %v597 = vunpack.c.l.b16 %v582
          %v598 = vunpack.c.l.b16 %v583
          %v599 = vpack.c.b16 %v596, %v595
          %v600 = vpack.c.b16 %v598, %v597
          %v604 = vsel %vm548, %v577, 0
          %606 = vmatprep.subr.bf16.mxu0 0
          %607 = vmatpush1.bf16.msra.mxu0 %v599
          %608 = vmatprep.subr.bf16.mxu0 0
          %609 = vmatpush1.bf16.msra.mxu0 %v600
          %610 = vmatprep.subr.bf16.mxu0 0
          %611 = vmatpush1.bf16.msra.mxu0 0
          %612 = vmatprep.subr.bf16.mxu0 0
          %613 = vmatpush1.bf16.msra.mxu0 0
          %614 = vmatprep.subr.bf16.mxu0 0
          %615 = vmatpush1.bf16.msra.mxu0 0
          %616 = vmatprep.subr.bf16.mxu0 0
          %617 = vmatpush1.bf16.msra.mxu0 0
          %618 = vmatprep.subr.bf16.mxu0 0
          %619 = vmatpush1.bf16.msra.mxu0 0
          %620 = vmatprep.subr.bf16.mxu0 0
          %621 = vmatpush1.bf16.msra.mxu0 0
          %622 = vmatprep.subr.bf16.mxu0 0
          %623 = vmatpush1.bf16.msra.mxu0 0
          %624 = vmatprep.subr.bf16.mxu0 0
          %625 = vmatpush1.bf16.msra.mxu0 0
          %626 = vmatprep.subr.bf16.mxu0 0
          %627 = vmatpush1.bf16.msra.mxu0 0
          %628 = vmatprep.subr.bf16.mxu0 0
          %629 = vmatpush1.bf16.msra.mxu0 0
          %630 = vmatprep.subr.bf16.mxu0 0
          %631 = vmatpush1.bf16.msra.mxu0 0
          %632 = vmatprep.subr.bf16.mxu0 0
          %633 = vmatpush1.bf16.msra.mxu0 0
          %634 = vmatprep.subr.bf16.mxu0 0
          %635 = vmatpush1.bf16.msra.mxu0 0
          %636 = vmatprep.subr.bf16.mxu0 0
          %637 = vmatpush1.bf16.msra.mxu0 0
          %638 = vmatprep.mubr.bf16.mxu0 0
          %639 = vmatmul.mubr.bf16.gmra.mrb[0].mxu0 %v604
          %v640 = vpop.f32.mrb[0].mxu0
          %v641 = vadd.f32 %v589, %v640
          %v642 = vpop.f32.mrb[0].mxu0
          %v643 = vpop.f32.mrb[0].mxu0
          %v644 = vpop.f32.mrb[0].mxu0
          %645 = vdwg.mxu0
          %v646 = vld [vmem:[#allocation14] sm:$0x1]
          %v647 = vld [vmem:[%s10] sm:$0x1]
          %vm648 = vcmask 64512
          %v649 = vsel %vm648, %v641, 0.0
          %650 = vadd.xlane.f32.xlu0 %v649
          %v651 = vpop.xlane.xlu0 %650
          %v652 = vrcp.pop 8.0
          %v653 = vmul.f32 %v651, %v652
          %v654 = vsub.f32 %v641, %v653
          %v655 = vmul.f32 %v654, %v654
          %v656 = vsel %vm648, %v655, 0.0
          %657 = vadd.xlane.f32.xlu0 %v656
          %v658 = vpop.xlane.xlu0 %657
          %v659 = vmul.f32 %v658, %v652
          %v660 = vadd.f32 %v659, 1e-05
          %v661 = vrsqrt.pop %v660
          %v662 = vmul.f32 %v654, %v661
          %v664 = vlaneseq
          %v665 = vshrl.u32 %v664, 7
          %v666 = vsub.s32 0, %v665
          %v667 = vrot.slane %v646, %v666
          %v669 = vmul.f32 %v662, %v667
          %v671 = vlaneseq
          %v672 = vshrl.u32 %v671, 7
          %v673 = vsub.s32 0, %v672
          %v674 = vrot.slane %v647, %v673
          %v676 = vadd.f32 %v669, %v674
          %v677 = vpack.c.bf16 %v676, %v676
          %vm678 = vcmask 60416
          %679 = vst.msk [vmem:[#allocation3] sm:$0xf] %vm678, %v677
          %v680 = vpack.c.bf16 %v641, %v641
          %v682 = vunpack.c.l.b16 %v680
          %v683 = vpack.c.b16 %v682, %v682
          %684 = vrot.lane.b32.xlu0 %v683, 96
          %v685 = vpop.permute.xlu0 %684
          %687 = vst.msk [vmem:[#allocation4] sm:$0xf] %vm678, %v685
          %v688 = vld [vmem:[#allocation14] sm:$0x1]
          %v689 = vld [vmem:[%s10] sm:$0x1]
          %691 = vrot.lane.b32.xlu0 %v641, 120
          %v692 = vpop.permute.xlu0 %691
          %v694 = vsel %vm648, %v692, 0.0
          %695 = vadd.xlane.f32.xlu0 %v694
          %v696 = vpop.xlane.xlu0 %695
          %v697 = vmul.f32 %v696, %v652
          %v698 = vsub.f32 %v641, %v697
          %v699 = vmul.f32 %v698, %v698
          %701 = vrot.lane.b32.xlu0 %v699, 120
          %v702 = vpop.permute.xlu0 %701
          %v704 = vsel %vm648, %v702, 0.0
          %705 = vadd.xlane.f32.xlu0 %v704
          %v706 = vpop.xlane.xlu0 %705
          %v707 = vmul.f32 %v706, %v652
          %v708 = vadd.f32 %v707, 1e-05
          %v709 = vrsqrt.pop %v708
          %v710 = vmul.f32 %v698, %v709
          %v712 = vlaneseq
          %v713 = vshrl.u32 %v712, 7
          %v714 = vsub.s32 0, %v713
          %v715 = vrot.slane %v688, %v714
          %716 = vrot.lane.b32.xlu0 %v715, 8
          %v717 = vpop.permute.xlu0 %716
          %v719 = vmul.f32 %v710, %v717
          %v721 = vlaneseq
          %v722 = vshrl.u32 %v721, 7
          %v723 = vsub.s32 0, %v722
          %v724 = vrot.slane %v689, %v723
          %725 = vrot.lane.b32.xlu0 %v724, 8
          %v726 = vpop.permute.xlu0 %725
          %v728 = vadd.f32 %v719, %v726
          %v729 = vpack.c.bf16 %v728, %v728
          %v731 = vunpack.c.l.b16 %v729
          %v732 = vpack.c.b16 %v731, %v731
          %733 = vrot.lane.b32.xlu0 %v732, 120
          %v734 = vpop.permute.xlu0 %733
          %s736 = scalar_lea.vmem [#allocation3], 4
          %737 = vst.msk [vmem:[%s736] sm:$0xf] %vm678, %v734
          %738 = vrot.lane.b32.xlu0 %v683, 88
          %v739 = vpop.permute.xlu0 %738
          %s741 = scalar_lea.vmem [#allocation4], 4
          %742 = vst.msk [vmem:[%s741] sm:$0xf] %vm678, %v739
          %v743 = vld [vmem:[#allocation14] sm:$0x1]
          %v744 = vld [vmem:[%s10] sm:$0x1]
          %745 = vrot.lane.b32.xlu0 %v641, 112
          %v746 = vpop.permute.xlu0 %745
          %v748 = vsel %vm648, %v746, 0.0
          %749 = vadd.xlane.f32.xlu0 %v748
          %v750 = vpop.xlane.xlu0 %749
          %v751 = vmul.f32 %v750, %v652
          %v752 = vsub.f32 %v641, %v751
          %v753 = vmul.f32 %v752, %v752
          %755 = vrot.lane.b32.xlu0 %v753, 112
          %v756 = vpop.permute.xlu0 %755
          %v758 = vsel %vm648, %v756, 0.0
          %759 = vadd.xlane.f32.xlu0 %v758
          %v760 = vpop.xlane.xlu0 %759
          %v761 = vmul.f32 %v760, %v652
          %v762 = vadd.f32 %v761, 1e-05
          %v763 = vrsqrt.pop %v762
          %v764 = vmul.f32 %v752, %v763
          %v766 = vlaneseq
          %v767 = vshrl.u32 %v766, 7
          %v768 = vsub.s32 0, %v767
          %v769 = vrot.slane %v743, %v768
          %770 = vrot.lane.b32.xlu0 %v769, 16
          %v771 = vpop.permute.xlu0 %770
          %v773 = vmul.f32 %v764, %v771
          %v775 = vlaneseq
          %v776 = vshrl.u32 %v775, 7
          %v777 = vsub.s32 0, %v776
          %v778 = vrot.slane %v744, %v777
          %779 = vrot.lane.b32.xlu0 %v778, 16
          %v780 = vpop.permute.xlu0 %779
          %v782 = vadd.f32 %v773, %v780
          %v783 = vpack.c.bf16 %v782, %v782
          %v785 = vunpack.c.l.b16 %v783
          %v786 = vpack.c.b16 %v785, %v785
          %787 = vrot.lane.b32.xlu0 %v786, 112
          %v788 = vpop.permute.xlu0 %787
          %s790 = scalar_lea.vmem [#allocation3], 8
          %791 = vst.msk [vmem:[%s790] sm:$0xf] %vm678, %v788
          %792 = vrot.lane.b32.xlu0 %v683, 80
          %v793 = vpop.permute.xlu0 %792
          %s795 = scalar_lea.vmem [#allocation4], 8
          %796 = vst.msk [vmem:[%s795] sm:$0xf] %vm678, %v793
          %v797 = vld [vmem:[#allocation14] sm:$0x1]
          %v798 = vld [vmem:[%s10] sm:$0x1]
          %799 = vrot.lane.b32.xlu0 %v641, 104
          %v800 = vpop.permute.xlu0 %799
          %v802 = vsel %vm648, %v800, 0.0
          %803 = vadd.xlane.f32.xlu0 %v802
          %v804 = vpop.xlane.xlu0 %803
          %v805 = vmul.f32 %v804, %v652
          %v806 = vsub.f32 %v641, %v805
          %v807 = vmul.f32 %v806, %v806
          %809 = vrot.lane.b32.xlu0 %v807, 104
          %v810 = vpop.permute.xlu0 %809
          %v812 = vsel %vm648, %v810, 0.0
          %813 = vadd.xlane.f32.xlu0 %v812
          %v814 = vpop.xlane.xlu0 %813
          %v815 = vmul.f32 %v814, %v652
          %v816 = vadd.f32 %v815, 1e-05
          %v817 = vrsqrt.pop %v816
          %v818 = vmul.f32 %v806, %v817
          %v820 = vlaneseq
          %v821 = vshrl.u32 %v820, 7
          %v822 = vsub.s32 0, %v821
          %v823 = vrot.slane %v797, %v822
          %824 = vrot.lane.b32.xlu0 %v823, 24
          %v825 = vpop.permute.xlu0 %824
          %v827 = vmul.f32 %v818, %v825
          %v829 = vlaneseq
          %v830 = vshrl.u32 %v829, 7
          %v831 = vsub.s32 0, %v830
          %v832 = vrot.slane %v798, %v831
          %833 = vrot.lane.b32.xlu0 %v832, 24
          %v834 = vpop.permute.xlu0 %833
          %v836 = vadd.f32 %v827, %v834
          %v837 = vpack.c.bf16 %v836, %v836
          %v839 = vunpack.c.l.b16 %v837
          %v840 = vpack.c.b16 %v839, %v839
          %841 = vrot.lane.b32.xlu0 %v840, 104
          %v842 = vpop.permute.xlu0 %841
          %s844 = scalar_lea.vmem [#allocation3], 12
          %845 = vst.msk [vmem:[%s844] sm:$0xf] %vm678, %v842
          %846 = vrot.lane.b32.xlu0 %v683, 72
          %v847 = vpop.permute.xlu0 %846
          %s849 = scalar_lea.vmem [#allocation4], 12
          %850 = vst.msk [vmem:[%s849] sm:$0xf] %vm678, %v847
        $region100: #{tpu_custom_call.1} parent=75 // pred_fallthru
          _
        %s851 = smul.u32 %s36, 8
        %s852 = sshra.s32 %s851, 3
        %s853 = sand.u32 %s851, 7
        %s854 = smul.addr %s852, 4
        %s855 = scalar_lea.vmem [#allocation2], %s854
        %v856 = vld [vmem:[%s855] sm:$0xf]
        %v857 = vld [vmem:[%s5] sm:$0xff]
        %v858 = vld [vmem:[%s5 + $0x8] sm:$0xf]
        %v859 = vld [vmem:[%s5 + $0xc] sm:$0xff]
        %v860 = vld [vmem:[%s5 + $0x14] sm:$0xf]
        %v861 = vld [vmem:[%s5 + $0x18] sm:$0xff]
        %v862 = vld [vmem:[%s5 + $0x20] sm:$0xf]
        %v863 = vld [vmem:[%s5 + $0x24] sm:$0xff]
        %v864 = vld [vmem:[%s5 + $0x2c] sm:$0xf]
        %v865 = vld [vmem:[#allocation9] sm:$0x7]
        %v867 = vlaneseq
        %v868 = vshrl.u32 %v867, 7
        %v869 = vsub.s32 0, %v868
        %v870 = vrot.slane %v865, %v869
        %v871 = vlaneseq
        %v872 = vshrl.u32 %v871, 7
        %v873 = vsub.s32 1, %v872
        %v874 = vrot.slane %v865, %v873
        %v875 = vlaneseq
        %v876 = vshrl.u32 %v875, 7
        %v877 = vsub.s32 2, %v876
        %v878 = vrot.slane %v865, %v877
        %v890 = vunpack.c.l.b16 %v857
        %v891 = vunpack.c.h.b16 %v857
        %v892 = vunpack.c.l.b16 %v858
        %v893 = vunpack.c.l.b16 %v859
        %v894 = vunpack.c.h.b16 %v859
        %v895 = vunpack.c.l.b16 %v860
        %v896 = vunpack.c.l.b16 %v861
        %v897 = vunpack.c.h.b16 %v861
        %v898 = vunpack.c.l.b16 %v862
        %v899 = vunpack.c.l.b16 %v863
        %v900 = vunpack.c.h.b16 %v863
        %v901 = vunpack.c.l.b16 %v864
        %v902 = vpack.c.b16 %v893, %v890
        %v903 = vpack.c.b16 %v894, %v891
        %v904 = vpack.c.b16 %v895, %v892
        %v905 = vpack.c.b16 %v899, %v896
        %v906 = vpack.c.b16 %v900, %v897
        %v907 = vpack.c.b16 %v901, %v898
        %vm914 = vcmask 261120
        %v916 = vsel %vm914, %v856, 0
        %918 = vmatprep.subr.bf16.mxu0 %v903
        %919 = vmatpush1.bf16.msra.mxu0 %v902
        %920 = vmatprep.subr.bf16.mxu0 %v906
        %921 = vmatpush1.bf16.msra.mxu0 %v905
        %922 = vmatprep.subr.bf16.mxu0 0
        %923 = vmatpush1.bf16.msra.mxu0 0
        %924 = vmatprep.subr.bf16.mxu0 0
        %925 = vmatpush1.bf16.msra.mxu0 0
        %926 = vmatprep.subr.bf16.mxu0 0
        %927 = vmatpush1.bf16.msra.mxu0 0
        %928 = vmatprep.subr.bf16.mxu0 0
        %929 = vmatpush1.bf16.msra.mxu0 0
        %930 = vmatprep.subr.bf16.mxu0 0
        %931 = vmatpush1.bf16.msra.mxu0 0
        %932 = vmatprep.subr.bf16.mxu0 0
        %933 = vmatpush1.bf16.msra.mxu0 0
        %934 = vmatprep.subr.bf16.mxu0 0
        %935 = vmatpush1.bf16.msra.mxu0 0
        %936 = vmatprep.subr.bf16.mxu0 0
        %937 = vmatpush1.bf16.msra.mxu0 0
        %938 = vmatprep.subr.bf16.mxu0 0
        %939 = vmatpush1.bf16.msra.mxu0 0
        %940 = vmatprep.subr.bf16.mxu0 0
        %941 = vmatpush1.bf16.msra.mxu0 0
        %942 = vmatprep.subr.bf16.mxu0 0
        %943 = vmatpush1.bf16.msra.mxu0 0
        %944 = vmatprep.subr.bf16.mxu0 0
        %945 = vmatpush1.bf16.msra.mxu0 0
        %946 = vmatprep.subr.bf16.mxu0 0
        %947 = vmatpush1.bf16.msra.mxu0 0
        %948 = vmatprep.subr.bf16.mxu0 0
        %949 = vmatpush1.bf16.msra.mxu0 0
        %950 = vmatprep.mubr.bf16.mxu0 0
        %951 = vmatmul.mubr.bf16.gmra.mrb[0].mxu0 %v916
        %v952 = vpop.f32.mrb[0].mxu0
        %v953 = vadd.f32 %v870, %v952
        %v954 = vpop.f32.mrb[0].mxu0
        %v955 = vadd.f32 %v874, %v954
        %v956 = vpop.f32.mrb[0].mxu0
        %v957 = vpop.f32.mrb[0].mxu0
        %958 = vdwg.mxu0
        %959 = vmatprep.subr.bf16.mxu0 0
        %960 = vmatpush1.bf16.msra.mxu0 %v904
        %961 = vmatprep.subr.bf16.mxu0 0
        %962 = vmatpush1.bf16.msra.mxu0 %v907
        %963 = vmatprep.subr.bf16.mxu0 0
        %964 = vmatpush1.bf16.msra.mxu0 0
        %965 = vmatprep.subr.bf16.mxu0 0
        %966 = vmatpush1.bf16.msra.mxu0 0
        %967 = vmatprep.subr.bf16.mxu0 0
        %968 = vmatpush1.bf16.msra.mxu0 0
        %969 = vmatprep.subr.bf16.mxu0 0
        %970 = vmatpush1.bf16.msra.mxu0 0
        %971 = vmatprep.subr.bf16.mxu0 0
        %972 = vmatpush1.bf16.msra.mxu0 0
        %973 = vmatprep.subr.bf16.mxu0 0
        %974 = vmatpush1.bf16.msra.mxu0 0
        %975 = vmatprep.subr.bf16.mxu0 0
        %976 = vmatpush1.bf16.msra.mxu0 0
        %977 = vmatprep.subr.bf16.mxu0 0
        %978 = vmatpush1.bf16.msra.mxu0 0
        %979 = vmatprep.subr.bf16.mxu0 0
        %980 = vmatpush1.bf16.msra.mxu0 0
        %981 = vmatprep.subr.bf16.mxu0 0
        %982 = vmatpush1.bf16.msra.mxu0 0
        %983 = vmatprep.subr.bf16.mxu0 0
        %984 = vmatpush1.bf16.msra.mxu0 0
        %985 = vmatprep.subr.bf16.mxu0 0
        %986 = vmatpush1.bf16.msra.mxu0 0
        %987 = vmatprep.subr.bf16.mxu0 0
        %988 = vmatpush1.bf16.msra.mxu0 0
        %989 = vmatprep.subr.bf16.mxu0 0
        %990 = vmatpush1.bf16.msra.mxu0 0
        %991 = vmatprep.mubr.bf16.mxu0 0
        %992 = vmatmul.mubr.bf16.gmra.mrb[0].mxu0 %v916
        %v993 = vpop.f32.mrb[0].mxu0
        %v994 = vadd.f32 %v878, %v993
        %v995 = vpop.f32.mrb[0].mxu0
        %v996 = vpop.f32.mrb[0].mxu0
        %v997 = vpop.f32.mrb[0].mxu0
        %998 = vdwg.mxu0
        %v999 = vld [vmem:[#allocation11] sm:$0x1]
        %v1000 = vld [vmem:[#allocation12] sm:$0x1]
        %vm1001 = vcmask 64512
        %v1002 = vsel %vm1001, %v953, 0.0
        %1003 = vadd.xlane.f32.xlu0 %v1002
        %v1004 = vpop.xlane.xlu0 %1003
        %v1005 = vrcp.pop 8.0
        %v1006 = vmul.f32 %v1004, %v1005
        %v1007 = vsub.f32 %v953, %v1006
        %v1008 = vmul.f32 %v1007, %v1007
        %v1009 = vsel %vm1001, %v1008, 0.0
        %1010 = vadd.xlane.f32.xlu0 %v1009
        %v1011 = vpop.xlane.xlu0 %1010
        %v1012 = vmul.f32 %v1011, %v1005
        %v1013 = vadd.f32 %v1012, 1e-05
        %v1014 = vrsqrt.pop %v1013
        %v1015 = vmul.f32 %v1007, %v1014
        %v1017 = vlaneseq
        %v1018 = vshrl.u32 %v1017, 7
        %v1019 = vsub.s32 0, %v1018
        %v1020 = vrot.slane %v999, %v1019
        %v1022 = vmul.f32 %v1015, %v1020
        %v1024 = vlaneseq
        %v1025 = vshrl.u32 %v1024, 7
        %v1026 = vsub.s32 0, %v1025
        %v1027 = vrot.slane %v1000, %v1026
        %v1029 = vadd.f32 %v1022, %v1027
        %v1030 = vmul.f32 %v1029, 0.35355338
        %v1031 = vpack.c.bf16 %v1030, %v1030
        %vm1032 = vcmask 60416
        %1033 = vst.msk [vmem:[#allocation5] sm:$0xf] %vm1032, %v1031
        %v1034 = vld [vmem:[#allocation11] sm:$0x1]
        %v1035 = vld [vmem:[#allocation12] sm:$0x1]
        %1037 = vrot.lane.b32.xlu0 %v953, 120
        %v1038 = vpop.permute.xlu0 %1037
        %v1040 = vsel %vm1001, %v1038, 0.0
        %1041 = vadd.xlane.f32.xlu0 %v1040
        %v1042 = vpop.xlane.xlu0 %1041
        %v1043 = vmul.f32 %v1042, %v1005
        %v1044 = vsub.f32 %v953, %v1043
        %v1045 = vmul.f32 %v1044, %v1044
        %1047 = vrot.lane.b32.xlu0 %v1045, 120
        %v1048 = vpop.permute.xlu0 %1047
        %v1050 = vsel %vm1001, %v1048, 0.0
        %1051 = vadd.xlane.f32.xlu0 %v1050
        %v1052 = vpop.xlane.xlu0 %1051
        %v1053 = vmul.f32 %v1052, %v1005
        %v1054 = vadd.f32 %v1053, 1e-05
        %v1055 = vrsqrt.pop %v1054
        %v1056 = vmul.f32 %v1044, %v1055
        %v1058 = vlaneseq
        %v1059 = vshrl.u32 %v1058, 7
        %v1060 = vsub.s32 0, %v1059
        %v1061 = vrot.slane %v1034, %v1060
        %1062 = vrot.lane.b32.xlu0 %v1061, 8
        %v1063 = vpop.permute.xlu0 %1062
        %v1065 = vmul.f32 %v1056, %v1063
        %v1067 = vlaneseq
        %v1068 = vshrl.u32 %v1067, 7
        %v1069 = vsub.s32 0, %v1068
        %v1070 = vrot.slane %v1035, %v1069
        %1071 = vrot.lane.b32.xlu0 %v1070, 8
        %v1072 = vpop.permute.xlu0 %1071
        %v1074 = vadd.f32 %v1065, %v1072
        %v1075 = vmul.f32 %v1074, 0.35355338
        %v1076 = vpack.c.bf16 %v1075, %v1075
        %v1078 = vunpack.c.l.b16 %v1076
        %v1079 = vpack.c.b16 %v1078, %v1078
        %1080 = vrot.lane.b32.xlu0 %v1079, 120
        %v1081 = vpop.permute.xlu0 %1080
        %s1083 = scalar_lea.vmem [#allocation5], 4
        %1084 = vst.msk [vmem:[%s1083] sm:$0xf] %vm1032, %v1081
        %v1085 = vld [vmem:[#allocation11] sm:$0x1]
        %v1086 = vld [vmem:[#allocation12] sm:$0x1]
        %1087 = vrot.lane.b32.xlu0 %v953, 112
        %v1088 = vpop.permute.xlu0 %1087
        %v1090 = vsel %vm1001, %v1088, 0.0
        %1091 = vadd.xlane.f32.xlu0 %v1090
        %v1092 = vpop.xlane.xlu0 %1091
        %v1093 = vmul.f32 %v1092, %v1005
        %v1094 = vsub.f32 %v953, %v1093
        %v1095 = vmul.f32 %v1094, %v1094
        %1097 = vrot.lane.b32.xlu0 %v1095, 112
        %v1098 = vpop.permute.xlu0 %1097
        %v1100 = vsel %vm1001, %v1098, 0.0
        %1101 = vadd.xlane.f32.xlu0 %v1100
        %v1102 = vpop.xlane.xlu0 %1101
        %v1103 = vmul.f32 %v1102, %v1005
        %v1104 = vadd.f32 %v1103, 1e-05
        %v1105 = vrsqrt.pop %v1104
        %v1106 = vmul.f32 %v1094, %v1105
        %v1108 = vlaneseq
        %v1109 = vshrl.u32 %v1108, 7
        %v1110 = vsub.s32 0, %v1109
        %v1111 = vrot.slane %v1085, %v1110
        %1112 = vrot.lane.b32.xlu0 %v1111, 16
        %v1113 = vpop.permute.xlu0 %1112
        %v1115 = vmul.f32 %v1106, %v1113
        %v1117 = vlaneseq
        %v1118 = vshrl.u32 %v1117, 7
        %v1119 = vsub.s32 0, %v1118
        %v1120 = vrot.slane %v1086, %v1119
        %1121 = vrot.lane.b32.xlu0 %v1120, 16
        %v1122 = vpop.permute.xlu0 %1121
        %v1124 = vadd.f32 %v1115, %v1122
        %v1125 = vmul.f32 %v1124, 0.35355338
        %v1126 = vpack.c.bf16 %v1125, %v1125
        %v1128 = vunpack.c.l.b16 %v1126
        %v1129 = vpack.c.b16 %v1128, %v1128
        %1130 = vrot.lane.b32.xlu0 %v1129, 112
        %v1131 = vpop.permute.xlu0 %1130
        %s1133 = scalar_lea.vmem [#allocation5], 8
        %1134 = vst.msk [vmem:[%s1133] sm:$0xf] %vm1032, %v1131
        %v1135 = vld [vmem:[#allocation11] sm:$0x1]
        %v1136 = vld [vmem:[#allocation12] sm:$0x1]
        %1137 = vrot.lane.b32.xlu0 %v953, 104
        %v1138 = vpop.permute.xlu0 %1137
        %v1140 = vsel %vm1001, %v1138, 0.0
        %1141 = vadd.xlane.f32.xlu0 %v1140
        %v1142 = vpop.xlane.xlu0 %1141
        %v1143 = vmul.f32 %v1142, %v1005
        %v1144 = vsub.f32 %v953, %v1143
        %v1145 = vmul.f32 %v1144, %v1144
        %1147 = vrot.lane.b32.xlu0 %v1145, 104
        %v1148 = vpop.permute.xlu0 %1147
        %v1150 = vsel %vm1001, %v1148, 0.0
        %1151 = vadd.xlane.f32.xlu0 %v1150
        %v1152 = vpop.xlane.xlu0 %1151
        %v1153 = vmul.f32 %v1152, %v1005
        %v1154 = vadd.f32 %v1153, 1e-05
        %v1155 = vrsqrt.pop %v1154
        %v1156 = vmul.f32 %v1144, %v1155
        %v1158 = vlaneseq
        %v1159 = vshrl.u32 %v1158, 7
        %v1160 = vsub.s32 0, %v1159
        %v1161 = vrot.slane %v1135, %v1160
        %1162 = vrot.lane.b32.xlu0 %v1161, 24
        %v1163 = vpop.permute.xlu0 %1162
        %v1165 = vmul.f32 %v1156, %v1163
        %v1167 = vlaneseq
        %v1168 = vshrl.u32 %v1167, 7
        %v1169 = vsub.s32 0, %v1168
        %v1170 = vrot.slane %v1136, %v1169
        %1171 = vrot.lane.b32.xlu0 %v1170, 24
        %v1172 = vpop.permute.xlu0 %1171
        %v1174 = vadd.f32 %v1165, %v1172
        %v1175 = vmul.f32 %v1174, 0.35355338
        %v1176 = vpack.c.bf16 %v1175, %v1175
        %v1178 = vunpack.c.l.b16 %v1176
        %v1179 = vpack.c.b16 %v1178, %v1178
        %1180 = vrot.lane.b32.xlu0 %v1179, 104
        %v1181 = vpop.permute.xlu0 %1180
        %s1183 = scalar_lea.vmem [#allocation5], 12
        %1184 = vst.msk [vmem:[%s1183] sm:$0xf] %vm1032, %v1181
        %v1185 = vld [vmem:[#allocation5] sm:$0xf]
        %v1186 = vld [vmem:[#allocation5 + $0x4] sm:$0xf]
        %v1187 = vld [vmem:[#allocation5 + $0x8] sm:$0xf]
        %v1188 = vld [vmem:[#allocation5 + $0xc] sm:$0xf]
        %v1189 = vld [vmem:[#allocation3] sm:$0xf]
        %v1190 = vld [vmem:[#allocation3 + $0x4] sm:$0xf]
        %v1191 = vld [vmem:[#allocation3 + $0x8] sm:$0xf]
        %v1192 = vld [vmem:[#allocation3 + $0xc] sm:$0xf]
        %v1194 = vsel %vm1001, %v1185, 0
        %v1197 = vsel %vm1001, %v1189, 0
        %1199 = vmatprep.subr.bf16.mxu0 0
        %1200 = vmatpush1.bf16.xpose.msra.mxu0 %v1197
        %1201 = vmatprep.subr.bf16.mxu0 0
        %1202 = vmatpush1.bf16.xpose.msra.mxu0 0
        %1203 = vmatprep.subr.bf16.mxu0 0
        %1204 = vmatpush1.bf16.xpose.msra.mxu0 0
        %1205 = vmatprep.subr.bf16.mxu0 0
        %1206 = vmatpush1.bf16.xpose.msra.mxu0 0
        %1207 = vmatprep.subr.bf16.mxu0 0
        %1208 = vmatpush1.bf16.xpose.msra.mxu0 0
        %1209 = vmatprep.subr.bf16.mxu0 0
        %1210 = vmatpush1.bf16.xpose.msra.mxu0 0
        %1211 = vmatprep.subr.bf16.mxu0 0
        %1212 = vmatpush1.bf16.xpose.msra.mxu0 0
        %1213 = vmatprep.subr.bf16.mxu0 0
        %1214 = vmatpush1.bf16.xpose.msra.mxu0 0
        %1215 = vmatprep.subr.bf16.mxu0 0
        %1216 = vmatpush1.bf16.xpose.msra.mxu0 0
        %1217 = vmatprep.subr.bf16.mxu0 0
        %1218 = vmatpush1.bf16.xpose.msra.mxu0 0
        %1219 = vmatprep.subr.bf16.mxu0 0
        %1220 = vmatpush1.bf16.xpose.msra.mxu0 0
        %1221 = vmatprep.subr.bf16.mxu0 0
        %1222 = vmatpush1.bf16.xpose.msra.mxu0 0
        %1223 = vmatprep.subr.bf16.mxu0 0
        %1224 = vmatpush1.bf16.xpose.msra.mxu0 0
        %1225 = vmatprep.subr.bf16.mxu0 0
        %1226 = vmatpush1.bf16.xpose.msra.mxu0 0
        %1227 = vmatprep.subr.bf16.mxu0 0
        %1228 = vmatpush1.bf16.xpose.msra.mxu0 0
        %1229 = vmatprep.subr.bf16.mxu0 0
        %1230 = vmatpush1.bf16.xpose.msra.mxu0 0
        %1231 = vmatprep.mubr.bf16.mxu0 0
        %1232 = vmatmul.mubr.bf16.gmra.mrb[0].mxu0 %v1194
        %v1233 = vpop.f32.mrb[0].mxu0
        %v1234 = vadd.f32 0.0, %v1233
        %v1235 = vpop.f32.mrb[0].mxu0
        %v1236 = vpop.f32.mrb[0].mxu0
        %v1237 = vpop.f32.mrb[0].mxu0
        %1238 = vdwg.mxu0
        %v1240 = vsel %vm1001, %v1186, 0
        %v1243 = vsel %vm1001, %v1190, 0
        %1245 = vmatprep.subr.bf16.mxu0 0
        %1246 = vmatpush1.bf16.xpose.msra.mxu0 %v1243
        %1247 = vmatprep.subr.bf16.mxu0 0
        %1248 = vmatpush1.bf16.xpose.msra.mxu0 0
        %1249 = vmatprep.subr.bf16.mxu0 0
        %1250 = vmatpush1.bf16.xpose.msra.mxu0 0
        %1251 = vmatprep.subr.bf16.mxu0 0
        %1252 = vmatpush1.bf16.xpose.msra.mxu0 0
        %1253 = vmatprep.subr.bf16.mxu0 0
        %1254 = vmatpush1.bf16.xpose.msra.mxu0 0
        %1255 = vmatprep.subr.bf16.mxu0 0
        %1256 = vmatpush1.bf16.xpose.msra.mxu0 0
        %1257 = vmatprep.subr.bf16.mxu0 0
        %1258 = vmatpush1.bf16.xpose.msra.mxu0 0
        %1259 = vmatprep.subr.bf16.mxu0 0
        %1260 = vmatpush1.bf16.xpose.msra.mxu0 0
        %1261 = vmatprep.subr.bf16.mxu0 0
        %1262 = vmatpush1.bf16.xpose.msra.mxu0 0
        %1263 = vmatprep.subr.bf16.mxu0 0
        %1264 = vmatpush1.bf16.xpose.msra.mxu0 0
        %1265 = vmatprep.subr.bf16.mxu0 0
        %1266 = vmatpush1.bf16.xpose.msra.mxu0 0
        %1267 = vmatprep.subr.bf16.mxu0 0
        %1268 = vmatpush1.bf16.xpose.msra.mxu0 0
        %1269 = vmatprep.subr.bf16.mxu0 0
        %1270 = vmatpush1.bf16.xpose.msra.mxu0 0
        %1271 = vmatprep.subr.bf16.mxu0 0
        %1272 = vmatpush1.bf16.xpose.msra.mxu0 0
        %1273 = vmatprep.subr.bf16.mxu0 0
        %1274 = vmatpush1.bf16.xpose.msra.mxu0 0
        %1275 = vmatprep.subr.bf16.mxu0 0
        %1276 = vmatpush1.bf16.xpose.msra.mxu0 0
        %1277 = vmatprep.mubr.bf16.mxu0 0
        %1278 = vmatmul.mubr.bf16.gmra.mrb[0].mxu0 %v1240
        %v1279 = vpop.f32.mrb[0].mxu0
        %v1280 = vadd.f32 0.0, %v1279
        %v1281 = vpop.f32.mrb[0].mxu0
        %v1282 = vpop.f32.mrb[0].mxu0
        %v1283 = vpop.f32.mrb[0].mxu0
        %1284 = vdwg.mxu0
        %v1286 = vsel %vm1001, %v1187, 0
        %v1289 = vsel %vm1001, %v1191, 0
        %1291 = vmatprep.subr.bf16.mxu0 0
        %1292 = vmatpush1.bf16.xpose.msra.mxu0 %v1289
        %1293 = vmatprep.subr.bf16.mxu0 0
        %1294 = vmatpush1.bf16.xpose.msra.mxu0 0
        %1295 = vmatprep.subr.bf16.mxu0 0
        %1296 = vmatpush1.bf16.xpose.msra.mxu0 0
        %1297 = vmatprep.subr.bf16.mxu0 0
        %1298 = vmatpush1.bf16.xpose.msra.mxu0 0
        %1299 = vmatprep.subr.bf16.mxu0 0
        %1300 = vmatpush1.bf16.xpose.msra.mxu0 0
        %1301 = vmatprep.subr.bf16.mxu0 0
        %1302 = vmatpush1.bf16.xpose.msra.mxu0 0
        %1303 = vmatprep.subr.bf16.mxu0 0
        %1304 = vmatpush1.bf16.xpose.msra.mxu0 0
        %1305 = vmatprep.subr.bf16.mxu0 0
        %1306 = vmatpush1.bf16.xpose.msra.mxu0 0
        %1307 = vmatprep.subr.bf16.mxu0 0
        %1308 = vmatpush1.bf16.xpose.msra.mxu0 0
        %1309 = vmatprep.subr.bf16.mxu0 0
        %1310 = vmatpush1.bf16.xpose.msra.mxu0 0
        %1311 = vmatprep.subr.bf16.mxu0 0
        %1312 = vmatpush1.bf16.xpose.msra.mxu0 0
        %1313 = vmatprep.subr.bf16.mxu0 0
        %1314 = vmatpush1.bf16.xpose.msra.mxu0 0
        %1315 = vmatprep.subr.bf16.mxu0 0
        %1316 = vmatpush1.bf16.xpose.msra.mxu0 0
        %1317 = vmatprep.subr.bf16.mxu0 0
        %1318 = vmatpush1.bf16.xpose.msra.mxu0 0
        %1319 = vmatprep.subr.bf16.mxu0 0
        %1320 = vmatpush1.bf16.xpose.msra.mxu0 0
        %1321 = vmatprep.subr.bf16.mxu0 0
        %1322 = vmatpush1.bf16.xpose.msra.mxu0 0
        %1323 = vmatprep.mubr.bf16.mxu0 0
        %1324 = vmatmul.mubr.bf16.gmra.mrb[0].mxu0 %v1286
        %v1325 = vpop.f32.mrb[0].mxu0
        %v1326 = vadd.f32 0.0, %v1325
        %v1327 = vpop.f32.mrb[0].mxu0
        %v1328 = vpop.f32.mrb[0].mxu0
        %v1329 = vpop.f32.mrb[0].mxu0
        %1330 = vdwg.mxu0
        %v1332 = vsel %vm1001, %v1188, 0
        %v1335 = vsel %vm1001, %v1192, 0
        %1337 = vmatprep.subr.bf16.mxu0 0
        %1338 = vmatpush1.bf16.xpose.msra.mxu0 %v1335
        %1339 = vmatprep.subr.bf16.mxu0 0
        %1340 = vmatpush1.bf16.xpose.msra.mxu0 0
        %1341 = vmatprep.subr.bf16.mxu0 0
        %1342 = vmatpush1.bf16.xpose.msra.mxu0 0
        %1343 = vmatprep.subr.bf16.mxu0 0
        %1344 = vmatpush1.bf16.xpose.msra.mxu0 0
        %1345 = vmatprep.subr.bf16.mxu0 0
        %1346 = vmatpush1.bf16.xpose.msra.mxu0 0
        %1347 = vmatprep.subr.bf16.mxu0 0
        %1348 = vmatpush1.bf16.xpose.msra.mxu0 0
        %1349 = vmatprep.subr.bf16.mxu0 0
        %1350 = vmatpush1.bf16.xpose.msra.mxu0 0
        %1351 = vmatprep.subr.bf16.mxu0 0
        %1352 = vmatpush1.bf16.xpose.msra.mxu0 0
        %1353 = vmatprep.subr.bf16.mxu0 0
        %1354 = vmatpush1.bf16.xpose.msra.mxu0 0
        %1355 = vmatprep.subr.bf16.mxu0 0
        %1356 = vmatpush1.bf16.xpose.msra.mxu0 0
        %1357 = vmatprep.subr.bf16.mxu0 0
        %1358 = vmatpush1.bf16.xpose.msra.mxu0 0
        %1359 = vmatprep.subr.bf16.mxu0 0
        %1360 = vmatpush1.bf16.xpose.msra.mxu0 0
        %1361 = vmatprep.subr.bf16.mxu0 0
        %1362 = vmatpush1.bf16.xpose.msra.mxu0 0
        %1363 = vmatprep.subr.bf16.mxu0 0
        %1364 = vmatpush1.bf16.xpose.msra.mxu0 0
        %1365 = vmatprep.subr.bf16.mxu0 0
        %1366 = vmatpush1.bf16.xpose.msra.mxu0 0
        %1367 = vmatprep.subr.bf16.mxu0 0
        %1368 = vmatpush1.bf16.xpose.msra.mxu0 0
        %1369 = vmatprep.mubr.bf16.mxu0 0
        %1370 = vmatmul.mubr.bf16.gmra.mrb[0].mxu0 %v1332
        %v1371 = vpop.f32.mrb[0].mxu0
        %v1372 = vadd.f32 0.0, %v1371
        %v1373 = vpop.f32.mrb[0].mxu0
        %v1374 = vpop.f32.mrb[0].mxu0
        %v1375 = vpop.f32.mrb[0].mxu0
        %1376 = vdwg.mxu0
        %v1377 = vsel %vm1001, %v1234, -inf
        %1378 = vmax.xlane.f32.xlu0 %v1377
        %v1379 = vpop.xlane.xlu0 %1378
        %v1380 = vsel %vm1001, %v1280, -inf
        %1381 = vmax.xlane.f32.xlu0 %v1380
        %v1382 = vpop.xlane.xlu0 %1381
        %v1383 = vsel %vm1001, %v1326, -inf
        %1384 = vmax.xlane.f32.xlu0 %v1383
        %v1385 = vpop.xlane.xlu0 %1384
        %v1386 = vsel %vm1001, %v1372, -inf
        %1387 = vmax.xlane.f32.xlu0 %v1386
        %v1388 = vpop.xlane.xlu0 %1387
        %v1389 = vsub.f32 %v1234, %v1379
        %v1390 = vsub.f32 %v1280, %v1382
        %v1391 = vsub.f32 %v1326, %v1385
        %v1392 = vsub.f32 %v1372, %v1388
        %v1393 = vmul.f32 %v1389, 1.442695
        %v1394 = vpow.pop %v1393
        %v1395 = vmul.f32 %v1390, 1.442695
        %v1396 = vpow.pop %v1395
        %v1397 = vmul.f32 %v1391, 1.442695
        %v1398 = vpow.pop %v1397
        %v1399 = vmul.f32 %v1392, 1.442695
        %v1400 = vpow.pop %v1399
        %v1401 = vsel %vm1001, %v1394, 0.0
        %1402 = vadd.xlane.f32.xlu0 %v1401
        %v1403 = vpop.xlane.xlu0 %1402
        %v1404 = vsel %vm1001, %v1396, 0.0
        %1405 = vadd.xlane.f32.xlu0 %v1404
        %v1406 = vpop.xlane.xlu0 %1405
        %v1407 = vsel %vm1001, %v1398, 0.0
        %1408 = vadd.xlane.f32.xlu0 %v1407
        %v1409 = vpop.xlane.xlu0 %1408
        %v1410 = vsel %vm1001, %v1400, 0.0
        %1411 = vadd.xlane.f32.xlu0 %v1410
        %v1412 = vpop.xlane.xlu0 %1411
        %v1413 = vrcp.pop %v1403
        %v1414 = vrcp.pop %v1406
        %v1415 = vrcp.pop %v1409
        %v1416 = vrcp.pop %v1412
        %v1417 = vmul.f32 %v1394, %v1413
        %v1418 = vmul.f32 %v1396, %v1414
        %v1419 = vmul.f32 %v1398, %v1415
        %v1420 = vmul.f32 %v1400, %v1416
        %v1421 = vpack.c.bf16 %v1417, %v1417
        %v1422 = vpack.c.bf16 %v1418, %v1418
        %v1423 = vpack.c.bf16 %v1419, %v1419
        %v1424 = vpack.c.bf16 %v1420, %v1420
        %v1425 = vld [vmem:[#allocation4] sm:$0xf]
        %v1426 = vld [vmem:[#allocation4 + $0x4] sm:$0xf]
        %v1427 = vld [vmem:[#allocation4 + $0x8] sm:$0xf]
        %v1428 = vld [vmem:[#allocation4 + $0xc] sm:$0xf]
        %v1430 = vsel %vm1001, %v1421, 0
        %vm1432 = vcmask 1043456
        %v1434 = vsel %vm1432, %v1425, 0
        %1436 = vmatprep.subr.bf16.mxu0 0
        %1437 = vmatpush1.bf16.msra.mxu0 %v1434
        %1438 = vmatprep.subr.bf16.mxu0 0
        %1439 = vmatpush1.bf16.msra.mxu0 0
        %1440 = vmatprep.subr.bf16.mxu0 0
        %1441 = vmatpush1.bf16.msra.mxu0 0
        %1442 = vmatprep.subr.bf16.mxu0 0
        %1443 = vmatpush1.bf16.msra.mxu0 0
        %1444 = vmatprep.subr.bf16.mxu0 0
        %1445 = vmatpush1.bf16.msra.mxu0 0
        %1446 = vmatprep.subr.bf16.mxu0 0
        %1447 = vmatpush1.bf16.msra.mxu0 0
        %1448 = vmatprep.subr.bf16.mxu0 0
        %1449 = vmatpush1.bf16.msra.mxu0 0
        %1450 = vmatprep.subr.bf16.mxu0 0
        %1451 = vmatpush1.bf16.msra.mxu0 0
        %1452 = vmatprep.subr.bf16.mxu0 0
        %1453 = vmatpush1.bf16.msra.mxu0 0
        %1454 = vmatprep.subr.bf16.mxu0 0
        %1455 = vmatpush1.bf16.msra.mxu0 0
        %1456 = vmatprep.subr.bf16.mxu0 0
        %1457 = vmatpush1.bf16.msra.mxu0 0
        %1458 = vmatprep.subr.bf16.mxu0 0
        %1459 = vmatpush1.bf16.msra.mxu0 0
        %1460 = vmatprep.subr.bf16.mxu0 0
        %1461 = vmatpush1.bf16.msra.mxu0 0
        %1462 = vmatprep.subr.bf16.mxu0 0
        %1463 = vmatpush1.bf16.msra.mxu0 0
        %1464 = vmatprep.subr.bf16.mxu0 0
        %1465 = vmatpush1.bf16.msra.mxu0 0
        %1466 = vmatprep.subr.bf16.mxu0 0
        %1467 = vmatpush1.bf16.msra.mxu0 0
        %1468 = vmatprep.mubr.bf16.mxu0 0
        %1469 = vmatmul.mubr.bf16.gmra.mrb[0].mxu0 %v1430
        %v1470 = vpop.f32.mrb[0].mxu0
        %v1471 = vadd.f32 0.0, %v1470
        %v1472 = vpop.f32.mrb[0].mxu0
        %v1473 = vpop.f32.mrb[0].mxu0
        %v1474 = vpop.f32.mrb[0].mxu0
        %1475 = vdwg.mxu0
        %v1477 = vsel %vm1001, %v1422, 0
        %v1480 = vsel %vm1432, %v1426, 0
        %1482 = vmatprep.subr.bf16.mxu0 0
        %1483 = vmatpush1.bf16.msra.mxu0 %v1480
        %1484 = vmatprep.subr.bf16.mxu0 0
        %1485 = vmatpush1.bf16.msra.mxu0 0
        %1486 = vmatprep.subr.bf16.mxu0 0
        %1487 = vmatpush1.bf16.msra.mxu0 0
        %1488 = vmatprep.subr.bf16.mxu0 0
        %1489 = vmatpush1.bf16.msra.mxu0 0
        %1490 = vmatprep.subr.bf16.mxu0 0
        %1491 = vmatpush1.bf16.msra.mxu0 0
        %1492 = vmatprep.subr.bf16.mxu0 0
        %1493 = vmatpush1.bf16.msra.mxu0 0
        %1494 = vmatprep.subr.bf16.mxu0 0
        %1495 = vmatpush1.bf16.msra.mxu0 0
        %1496 = vmatprep.subr.bf16.mxu0 0
        %1497 = vmatpush1.bf16.msra.mxu0 0
        %1498 = vmatprep.subr.bf16.mxu0 0
        %1499 = vmatpush1.bf16.msra.mxu0 0
        %1500 = vmatprep.subr.bf16.mxu0 0
        %1501 = vmatpush1.bf16.msra.mxu0 0
        %1502 = vmatprep.subr.bf16.mxu0 0
        %1503 = vmatpush1.bf16.msra.mxu0 0
        %1504 = vmatprep.subr.bf16.mxu0 0
        %1505 = vmatpush1.bf16.msra.mxu0 0
        %1506 = vmatprep.subr.bf16.mxu0 0
        %1507 = vmatpush1.bf16.msra.mxu0 0
        %1508 = vmatprep.subr.bf16.mxu0 0
        %1509 = vmatpush1.bf16.msra.mxu0 0
        %1510 = vmatprep.subr.bf16.mxu0 0
        %1511 = vmatpush1.bf16.msra.mxu0 0
        %1512 = vmatprep.subr.bf16.mxu0 0
        %1513 = vmatpush1.bf16.msra.mxu0 0
        %1514 = vmatprep.mubr.bf16.mxu0 0
        %1515 = vmatmul.mubr.bf16.gmra.mrb[0].mxu0 %v1477
        %v1516 = vpop.f32.mrb[0].mxu0
        %v1517 = vadd.f32 0.0, %v1516
        %v1518 = vpop.f32.mrb[0].mxu0
        %v1519 = vpop.f32.mrb[0].mxu0
        %v1520 = vpop.f32.mrb[0].mxu0
        %1521 = vdwg.mxu0
        %v1523 = vsel %vm1001, %v1423, 0
        %v1526 = vsel %vm1432, %v1427, 0
        %1528 = vmatprep.subr.bf16.mxu0 0
        %1529 = vmatpush1.bf16.msra.mxu0 %v1526
        %1530 = vmatprep.subr.bf16.mxu0 0
        %1531 = vmatpush1.bf16.msra.mxu0 0
        %1532 = vmatprep.subr.bf16.mxu0 0
        %1533 = vmatpush1.bf16.msra.mxu0 0
        %1534 = vmatprep.subr.bf16.mxu0 0
        %1535 = vmatpush1.bf16.msra.mxu0 0
        %1536 = vmatprep.subr.bf16.mxu0 0
        %1537 = vmatpush1.bf16.msra.mxu0 0
        %1538 = vmatprep.subr.bf16.mxu0 0
        %1539 = vmatpush1.bf16.msra.mxu0 0
        %1540 = vmatprep.subr.bf16.mxu0 0
        %1541 = vmatpush1.bf16.msra.mxu0 0
        %1542 = vmatprep.subr.bf16.mxu0 0
        %1543 = vmatpush1.bf16.msra.mxu0 0
        %1544 = vmatprep.subr.bf16.mxu0 0
        %1545 = vmatpush1.bf16.msra.mxu0 0
        %1546 = vmatprep.subr.bf16.mxu0 0
        %1547 = vmatpush1.bf16.msra.mxu0 0
        %1548 = vmatprep.subr.bf16.mxu0 0
        %1549 = vmatpush1.bf16.msra.mxu0 0
        %1550 = vmatprep.subr.bf16.mxu0 0
        %1551 = vmatpush1.bf16.msra.mxu0 0
        %1552 = vmatprep.subr.bf16.mxu0 0
        %1553 = vmatpush1.bf16.msra.mxu0 0
        %1554 = vmatprep.subr.bf16.mxu0 0
        %1555 = vmatpush1.bf16.msra.mxu0 0
        %1556 = vmatprep.subr.bf16.mxu0 0
        %1557 = vmatpush1.bf16.msra.mxu0 0
        %1558 = vmatprep.subr.bf16.mxu0 0
        %1559 = vmatpush1.bf16.msra.mxu0 0
        %1560 = vmatprep.mubr.bf16.mxu0 0
        %1561 = vmatmul.mubr.bf16.gmra.mrb[0].mxu0 %v1523
        %v1562 = vpop.f32.mrb[0].mxu0
        %v1563 = vadd.f32 0.0, %v1562
        %v1564 = vpop.f32.mrb[0].mxu0
        %v1565 = vpop.f32.mrb[0].mxu0
        %v1566 = vpop.f32.mrb[0].mxu0
        %1567 = vdwg.mxu0
        %v1569 = vsel %vm1001, %v1424, 0
        %v1572 = vsel %vm1432, %v1428, 0
        %1574 = vmatprep.subr.bf16.mxu0 0
        %1575 = vmatpush1.bf16.msra.mxu0 %v1572
        %1576 = vmatprep.subr.bf16.mxu0 0
        %1577 = vmatpush1.bf16.msra.mxu0 0
        %1578 = vmatprep.subr.bf16.mxu0 0
        %1579 = vmatpush1.bf16.msra.mxu0 0
        %1580 = vmatprep.subr.bf16.mxu0 0
        %1581 = vmatpush1.bf16.msra.mxu0 0
        %1582 = vmatprep.subr.bf16.mxu0 0
        %1583 = vmatpush1.bf16.msra.mxu0 0
        %1584 = vmatprep.subr.bf16.mxu0 0
        %1585 = vmatpush1.bf16.msra.mxu0 0
        %1586 = vmatprep.subr.bf16.mxu0 0
        %1587 = vmatpush1.bf16.msra.mxu0 0
        %1588 = vmatprep.subr.bf16.mxu0 0
        %1589 = vmatpush1.bf16.msra.mxu0 0
        %1590 = vmatprep.subr.bf16.mxu0 0
        %1591 = vmatpush1.bf16.msra.mxu0 0
        %1592 = vmatprep.subr.bf16.mxu0 0
        %1593 = vmatpush1.bf16.msra.mxu0 0
        %1594 = vmatprep.subr.bf16.mxu0 0
        %1595 = vmatpush1.bf16.msra.mxu0 0
        %1596 = vmatprep.subr.bf16.mxu0 0
        %1597 = vmatpush1.bf16.msra.mxu0 0
        %1598 = vmatprep.subr.bf16.mxu0 0
        %1599 = vmatpush1.bf16.msra.mxu0 0
        %1600 = vmatprep.subr.bf16.mxu0 0
        %1601 = vmatpush1.bf16.msra.mxu0 0
        %1602 = vmatprep.subr.bf16.mxu0 0
        %1603 = vmatpush1.bf16.msra.mxu0 0
        %1604 = vmatprep.subr.bf16.mxu0 0
        %1605 = vmatpush1.bf16.msra.mxu0 0
        %1606 = vmatprep.mubr.bf16.mxu0 0
        %1607 = vmatmul.mubr.bf16.gmra.mrb[0].mxu0 %v1569
        %v1608 = vpop.f32.mrb[0].mxu0
        %v1609 = vadd.f32 0.0, %v1608
        %v1610 = vpop.f32.mrb[0].mxu0
        %v1611 = vpop.f32.mrb[0].mxu0
        %v1612 = vpop.f32.mrb[0].mxu0
        %1613 = vdwg.mxu0
        %v1614 = vxor.u32 %v953, 2147483648
        %v1615 = vxor.u32 %v955, 2147483648
        %v1616 = vmul.f32 %v1614, 1.442695
        %v1617 = vpow.pop %v1616
        %v1618 = vmul.f32 %v1615, 1.442695
        %v1619 = vpow.pop %v1618
        %v1620 = vadd.f32 %v1617, 1.0
        %v1621 = vadd.f32 %v1619, 1.0
        %v1622 = vrcp.pop %v1620
        %v1623 = vmul.f32 1.0, %v1622
        %v1624 = vrcp.pop %v1621
        %v1625 = vmul.f32 1.0, %v1624
        %v1626 = vmul.f32 %v953, %v1623
        %v1627 = vmul.f32 %v955, %v1625
        %v1628 = vmul.f32 %v1626, %v955
        %v1629 = vmul.f32 %v1627, %v994
        %v1630 = vpack.c.bf16 %v1628, %v1628
        %v1631 = vpack.c.bf16 %v1629, %v1629
        %v1632 = vld [vmem:[%s12] sm:$0xf]
        %v1633 = vld [vmem:[%s12 + $0x4] sm:$0xf]
        %v1634 = vld [vmem:[%s12 + $0x8] sm:$0xf]
        %v1635 = vld [vmem:[%s12 + $0xc] sm:$0xf]
        %v1636 = vld [vmem:[%s12 + $0x10] sm:$0xf]
        %v1637 = vld [vmem:[%s12 + $0x14] sm:$0xf]
        %v1638 = vld [vmem:[%s12 + $0x18] sm:$0xf]
        %v1639 = vld [vmem:[%s12 + $0x1c] sm:$0xf]
        %v1640 = vld [vmem:[%s12 + $0x20] sm:$0xf]
        %v1641 = vld [vmem:[%s12 + $0x24] sm:$0xf]
        %v1642 = vld [vmem:[%s12 + $0x28] sm:$0xf]
        %v1643 = vld [vmem:[%s12 + $0x2c] sm:$0xf]
        %v1644 = vld [vmem:[%s12 + $0x30] sm:$0xf]
        %v1645 = vld [vmem:[%s12 + $0x34] sm:$0xf]
        %v1646 = vld [vmem:[%s12 + $0x38] sm:$0xf]
        %v1647 = vld [vmem:[%s12 + $0x3c] sm:$0xf]
        %v1648 = vpack.c.bf16 %v1471, %v1471
        %v1649 = vld [vmem:[%s11] sm:$0xf]
        %v1651 = vsel %vm1001, %v1648, 0
        %v1654 = vsel %vm1432, %v1649, 0
        %1656 = vmatprep.subr.bf16.mxu0 0
        %1657 = vmatpush1.bf16.msra.mxu0 %v1654
        %1658 = vmatprep.subr.bf16.mxu0 0
        %1659 = vmatpush1.bf16.msra.mxu0 0
        %1660 = vmatprep.subr.bf16.mxu0 0
        %1661 = vmatpush1.bf16.msra.mxu0 0
        %1662 = vmatprep.subr.bf16.mxu0 0
        %1663 = vmatpush1.bf16.msra.mxu0 0
        %1664 = vmatprep.subr.bf16.mxu0 0
        %1665 = vmatpush1.bf16.msra.mxu0 0
        %1666 = vmatprep.subr.bf16.mxu0 0
        %1667 = vmatpush1.bf16.msra.mxu0 0
        %1668 = vmatprep.subr.bf16.mxu0 0
        %1669 = vmatpush1.bf16.msra.mxu0 0
        %1670 = vmatprep.subr.bf16.mxu0 0
        %1671 = vmatpush1.bf16.msra.mxu0 0
        %1672 = vmatprep.subr.bf16.mxu0 0
        %1673 = vmatpush1.bf16.msra.mxu0 0
        %1674 = vmatprep.subr.bf16.mxu0 0
        %1675 = vmatpush1.bf16.msra.mxu0 0
        %1676 = vmatprep.subr.bf16.mxu0 0
        %1677 = vmatpush1.bf16.msra.mxu0 0
        %1678 = vmatprep.subr.bf16.mxu0 0
        %1679 = vmatpush1.bf16.msra.mxu0 0
        %1680 = vmatprep.subr.bf16.mxu0 0
        %1681 = vmatpush1.bf16.msra.mxu0 0
        %1682 = vmatprep.subr.bf16.mxu0 0
        %1683 = vmatpush1.bf16.msra.mxu0 0
        %1684 = vmatprep.subr.bf16.mxu0 0
        %1685 = vmatpush1.bf16.msra.mxu0 0
        %1686 = vmatprep.subr.bf16.mxu0 0
        %1687 = vmatpush1.bf16.msra.mxu0 0
        %1688 = vmatprep.mubr.bf16.mxu0 0
        %1689 = vmatmul.mubr.bf16.gmra.mrb[0].mxu0 %v1651
        %v1690 = vpop.f32.mrb[0].mxu0
        %v1691 = vadd.f32 0.0, %v1690
        %v1692 = vpop.f32.mrb[0].mxu0
        %v1693 = vpop.f32.mrb[0].mxu0
        %v1694 = vpop.f32.mrb[0].mxu0
        %1695 = vdwg.mxu0
        %1698 = vrot.lane.b32.xlu0 %v1630, 96
        %v1699 = vpop.permute.xlu0 %1698
        %1700 = vrot.lane.b32.xlu0 %v1631, 96
        %v1701 = vpop.permute.xlu0 %1700
        %vm1702 = vcmask 785408
        %v1703 = vsel %vm1702, %v1699, %v1701
        %v1721 = vunpack.c.l.b16 %v1632
        %v1722 = vunpack.c.l.b16 %v1633
        %v1723 = vunpack.c.l.b16 %v1634
        %v1724 = vunpack.c.l.b16 %v1635
        %v1725 = vunpack.c.l.b16 %v1636
        %v1726 = vunpack.c.l.b16 %v1637
        %v1727 = vunpack.c.l.b16 %v1638
        %v1728 = vunpack.c.l.b16 %v1639
        %v1729 = vunpack.c.l.b16 %v1640
        %v1730 = vunpack.c.l.b16 %v1641
        %v1731 = vunpack.c.l.b16 %v1642
        %v1732 = vunpack.c.l.b16 %v1643
        %v1733 = vunpack.c.l.b16 %v1644
        %v1734 = vunpack.c.l.b16 %v1645
        %v1735 = vunpack.c.l.b16 %v1646
        %v1736 = vunpack.c.l.b16 %v1647
        %v1737 = vpack.c.b16 %v1722, %v1721
        %v1738 = vpack.c.b16 %v1724, %v1723
        %v1739 = vpack.c.b16 %v1726, %v1725
        %v1740 = vpack.c.b16 %v1728, %v1727
        %v1741 = vpack.c.b16 %v1730, %v1729
        %v1742 = vpack.c.b16 %v1732, %v1731
        %v1743 = vpack.c.b16 %v1734, %v1733
        %v1744 = vpack.c.b16 %v1736, %v1735
        %1753 = vmatprep.subr.bf16.mxu0 0
        %1754 = vmatpush1.bf16.msra.mxu0 %v1737
        %1755 = vmatprep.subr.bf16.mxu0 0
        %1756 = vmatpush1.bf16.msra.mxu0 %v1738
        %1757 = vmatprep.subr.bf16.mxu0 0
        %1758 = vmatpush1.bf16.msra.mxu0 %v1739
        %1759 = vmatprep.subr.bf16.mxu0 0
        %1760 = vmatpush1.bf16.msra.mxu0 %v1740
        %1761 = vmatprep.subr.bf16.mxu0 0
        %1762 = vmatpush1.bf16.msra.mxu0 %v1741
        %1763 = vmatprep.subr.bf16.mxu0 0
        %1764 = vmatpush1.bf16.msra.mxu0 %v1742
        %1765 = vmatprep.subr.bf16.mxu0 0
        %1766 = vmatpush1.bf16.msra.mxu0 %v1743
        %1767 = vmatprep.subr.bf16.mxu0 0
        %1768 = vmatpush1.bf16.msra.mxu0 %v1744
        %1769 = vmatprep.subr.bf16.mxu0 0
        %1770 = vmatpush1.bf16.msra.mxu0 0
        %1771 = vmatprep.subr.bf16.mxu0 0
        %1772 = vmatpush1.bf16.msra.mxu0 0
        %1773 = vmatprep.subr.bf16.mxu0 0
        %1774 = vmatpush1.bf16.msra.mxu0 0
        %1775 = vmatprep.subr.bf16.mxu0 0
        %1776 = vmatpush1.bf16.msra.mxu0 0
        %1777 = vmatprep.subr.bf16.mxu0 0
        %1778 = vmatpush1.bf16.msra.mxu0 0
        %1779 = vmatprep.subr.bf16.mxu0 0
        %1780 = vmatpush1.bf16.msra.mxu0 0
        %1781 = vmatprep.subr.bf16.mxu0 0
        %1782 = vmatpush1.bf16.msra.mxu0 0
        %1783 = vmatprep.subr.bf16.mxu0 0
        %1784 = vmatpush1.bf16.msra.mxu0 0
        %1785 = vmatprep.mubr.bf16.mxu0 0
        %1786 = vmatmul.mubr.bf16.gmra.mrb[0].mxu0 %v1703
        %v1787 = vpop.f32.mrb[0].mxu0
        %v1788 = vadd.f32 %v1691, %v1787
        %v1789 = vpop.f32.mrb[0].mxu0
        %v1790 = vpop.f32.mrb[0].mxu0
        %v1791 = vpop.f32.mrb[0].mxu0
        %1792 = vdwg.mxu0
        %v1793 = vpack.c.bf16 %v1517, %v1517
        %s1794 = scalar_lea.vmem %s11, 4
        %v1795 = vld [vmem:[%s1794] sm:$0xf]
        %v1797 = vsel %vm1001, %v1793, 0
        %v1800 = vsel %vm1432, %v1795, 0
        %1802 = vmatprep.subr.bf16.mxu0 0
        %1803 = vmatpush1.bf16.msra.mxu0 %v1800
        %1804 = vmatprep.subr.bf16.mxu0 0
        %1805 = vmatpush1.bf16.msra.mxu0 0
        %1806 = vmatprep.subr.bf16.mxu0 0
        %1807 = vmatpush1.bf16.msra.mxu0 0
        %1808 = vmatprep.subr.bf16.mxu0 0
        %1809 = vmatpush1.bf16.msra.mxu0 0
        %1810 = vmatprep.subr.bf16.mxu0 0
        %1811 = vmatpush1.bf16.msra.mxu0 0
        %1812 = vmatprep.subr.bf16.mxu0 0
        %1813 = vmatpush1.bf16.msra.mxu0 0
        %1814 = vmatprep.subr.bf16.mxu0 0
        %1815 = vmatpush1.bf16.msra.mxu0 0
        %1816 = vmatprep.subr.bf16.mxu0 0
        %1817 = vmatpush1.bf16.msra.mxu0 0
        %1818 = vmatprep.subr.bf16.mxu0 0
        %1819 = vmatpush1.bf16.msra.mxu0 0
        %1820 = vmatprep.subr.bf16.mxu0 0
        %1821 = vmatpush1.bf16.msra.mxu0 0
        %1822 = vmatprep.subr.bf16.mxu0 0
        %1823 = vmatpush1.bf16.msra.mxu0 0
        %1824 = vmatprep.subr.bf16.mxu0 0
        %1825 = vmatpush1.bf16.msra.mxu0 0
        %1826 = vmatprep.subr.bf16.mxu0 0
        %1827 = vmatpush1.bf16.msra.mxu0 0
        %1828 = vmatprep.subr.bf16.mxu0 0
        %1829 = vmatpush1.bf16.msra.mxu0 0
        %1830 = vmatprep.subr.bf16.mxu0 0
        %1831 = vmatpush1.bf16.msra.mxu0 0
        %1832 = vmatprep.subr.bf16.mxu0 0
        %1833 = vmatpush1.bf16.msra.mxu0 0
        %1834 = vmatprep.mubr.bf16.mxu0 0
        %1835 = vmatmul.mubr.bf16.gmra.mrb[0].mxu0 %v1797
        %v1836 = vpop.f32.mrb[0].mxu0
        %v1837 = vadd.f32 0.0, %v1836
        %v1838 = vpop.f32.mrb[0].mxu0
        %v1839 = vpop.f32.mrb[0].mxu0
        %v1840 = vpop.f32.mrb[0].mxu0
        %1841 = vdwg.mxu0
        %v1842 = vadd.f32 %v1788, %v1837
        %v1843 = vpack.c.bf16 %v1563, %v1563
        %s1844 = scalar_lea.vmem %s11, 8
        %v1845 = vld [vmem:[%s1844] sm:$0xf]
        %v1847 = vsel %vm1001, %v1843, 0
        %v1850 = vsel %vm1432, %v1845, 0
        %1852 = vmatprep.subr.bf16.mxu0 0
        %1853 = vmatpush1.bf16.msra.mxu0 %v1850
        %1854 = vmatprep.subr.bf16.mxu0 0
        %1855 = vmatpush1.bf16.msra.mxu0 0
        %1856 = vmatprep.subr.bf16.mxu0 0
        %1857 = vmatpush1.bf16.msra.mxu0 0
        %1858 = vmatprep.subr.bf16.mxu0 0
        %1859 = vmatpush1.bf16.msra.mxu0 0
        %1860 = vmatprep.subr.bf16.mxu0 0
        %1861 = vmatpush1.bf16.msra.mxu0 0
        %1862 = vmatprep.subr.bf16.mxu0 0
        %1863 = vmatpush1.bf16.msra.mxu0 0
        %1864 = vmatprep.subr.bf16.mxu0 0
        %1865 = vmatpush1.bf16.msra.mxu0 0
        %1866 = vmatprep.subr.bf16.mxu0 0
        %1867 = vmatpush1.bf16.msra.mxu0 0
        %1868 = vmatprep.subr.bf16.mxu0 0
        %1869 = vmatpush1.bf16.msra.mxu0 0
        %1870 = vmatprep.subr.bf16.mxu0 0
        %1871 = vmatpush1.bf16.msra.mxu0 0
        %1872 = vmatprep.subr.bf16.mxu0 0
        %1873 = vmatpush1.bf16.msra.mxu0 0
        %1874 = vmatprep.subr.bf16.mxu0 0
        %1875 = vmatpush1.bf16.msra.mxu0 0
        %1876 = vmatprep.subr.bf16.mxu0 0
        %1877 = vmatpush1.bf16.msra.mxu0 0
        %1878 = vmatprep.subr.bf16.mxu0 0
        %1879 = vmatpush1.bf16.msra.mxu0 0
        %1880 = vmatprep.subr.bf16.mxu0 0
        %1881 = vmatpush1.bf16.msra.mxu0 0
        %1882 = vmatprep.subr.bf16.mxu0 0
        %1883 = vmatpush1.bf16.msra.mxu0 0
        %1884 = vmatprep.mubr.bf16.mxu0 0
        %1885 = vmatmul.mubr.bf16.gmra.mrb[0].mxu0 %v1847
        %v1886 = vpop.f32.mrb[0].mxu0
        %v1887 = vadd.f32 0.0, %v1886
        %v1888 = vpop.f32.mrb[0].mxu0
        %v1889 = vpop.f32.mrb[0].mxu0
        %v1890 = vpop.f32.mrb[0].mxu0
        %1891 = vdwg.mxu0
        %v1892 = vadd.f32 %v1842, %v1887
        %v1893 = vpack.c.bf16 %v1609, %v1609
        %s1894 = scalar_lea.vmem %s11, 12
        %v1895 = vld [vmem:[%s1894] sm:$0xf]
        %v1897 = vsel %vm1001, %v1893, 0
        %v1900 = vsel %vm1432, %v1895, 0
        %1902 = vmatprep.subr.bf16.mxu0 0
        %1903 = vmatpush1.bf16.msra.mxu0 %v1900
        %1904 = vmatprep.subr.bf16.mxu0 0
        %1905 = vmatpush1.bf16.msra.mxu0 0
        %1906 = vmatprep.subr.bf16.mxu0 0
        %1907 = vmatpush1.bf16.msra.mxu0 0
        %1908 = vmatprep.subr.bf16.mxu0 0
        %1909 = vmatpush1.bf16.msra.mxu0 0
        %1910 = vmatprep.subr.bf16.mxu0 0
        %1911 = vmatpush1.bf16.msra.mxu0 0
        %1912 = vmatprep.subr.bf16.mxu0 0
        %1913 = vmatpush1.bf16.msra.mxu0 0
        %1914 = vmatprep.subr.bf16.mxu0 0
        %1915 = vmatpush1.bf16.msra.mxu0 0
        %1916 = vmatprep.subr.bf16.mxu0 0
        %1917 = vmatpush1.bf16.msra.mxu0 0
        %1918 = vmatprep.subr.bf16.mxu0 0
        %1919 = vmatpush1.bf16.msra.mxu0 0
        %1920 = vmatprep.subr.bf16.mxu0 0
        %1921 = vmatpush1.bf16.msra.mxu0 0
        %1922 = vmatprep.subr.bf16.mxu0 0
        %1923 = vmatpush1.bf16.msra.mxu0 0
        %1924 = vmatprep.subr.bf16.mxu0 0
        %1925 = vmatpush1.bf16.msra.mxu0 0
        %1926 = vmatprep.subr.bf16.mxu0 0
        %1927 = vmatpush1.bf16.msra.mxu0 0
        %1928 = vmatprep.subr.bf16.mxu0 0
        %1929 = vmatpush1.bf16.msra.mxu0 0
        %1930 = vmatprep.subr.bf16.mxu0 0
        %1931 = vmatpush1.bf16.msra.mxu0 0
        %1932 = vmatprep.subr.bf16.mxu0 0
        %1933 = vmatpush1.bf16.msra.mxu0 0
        %1934 = vmatprep.mubr.bf16.mxu0 0
        %1935 = vmatmul.mubr.bf16.gmra.mrb[0].mxu0 %v1897
        %v1936 = vpop.f32.mrb[0].mxu0
        %v1937 = vadd.f32 0.0, %v1936
        %v1938 = vpop.f32.mrb[0].mxu0
        %v1939 = vpop.f32.mrb[0].mxu0
        %v1940 = vpop.f32.mrb[0].mxu0
        %1941 = vdwg.mxu0
        %v1942 = vadd.f32 %v1892, %v1937
        %v1943 = vld [vmem:[%s13] sm:$0x1]
        %v1945 = vlaneseq
        %v1946 = vshrl.u32 %v1945, 7
        %v1947 = vsub.s32 0, %v1946
        %v1948 = vrot.slane %v1943, %v1947
        %v1950 = vadd.f32 %v1942, %v1948
        %s1951 = scalar_lea.vmem %s539, %s851
        %v1952 = vld [vmem:[%s1951] sm:$0xff]
        %v1953 = vadd.f32 %v1952, %v1950
        %1954 = vst.msk [vmem:[%s535] sm:$0xff] %vm914, %v1953
        %s1955 = sand.u32 %s352, 1
        %s1956 = scalar_lea.sflag [#allocation8], %s1955
        %s1957 = sand.u32 %s352, 1
        %s1958 = smul.addr %s1957, 8
        %s1959 = scalar_lea.vmem [#allocation15], %s1958
        // Predicated region
        $region101: #{tpu_custom_call.1} parent=75 // pred_check
          %p1960 = pneg %p362
        $region102: #{tpu_custom_call.1} parent=75 // pred_check_branch
          %1962 = sbr.rel (%p1960) target = $region104
        $region103: #{tpu_custom_call.1} parent=75 // pred_region
          %s1964 = ssub.s32 128, 128
          %1965 = vsyncadd %s1956, %s1964
          %s1966 = sadd.s32 %s36, %s35
          %s1967 = smul.addr %s1966, 128
          %s1968 = scalar_lea.hbm %s14, %s1967
          %s1970 = sshll.u32 %s1959, 4
          %s1971 = int_to_ptr.vmem [resolvable:$true] %s1970
          %1973 = dma.vmem_to_hbm [thread:$0]  %s1971, 128, %s1968, %s1956
        $region104: #{tpu_custom_call.1} parent=75 // pred_fallthru
          _
      $region76: #{tpu_custom_call.1} parent=5 // pred_fallthru
        _
      %p1974 = scmp.le.s32.totalorder 2, %s26
      // Predicated region
      $region105: #{tpu_custom_call.1} parent=5 // pred_check
        %p1975 = pneg %p1974
      $region106: #{tpu_custom_call.1} parent=5 // pred_check_branch
        %1977 = sbr.rel (%p1975) target = $region108
      $region107: #{tpu_custom_call.1} parent=5 // pred_region
        %s1978 = ssub.s32 %s26, 2
        // Predicated region
        $region109: #{tpu_custom_call.1} parent=107 // pred_check
          %p1979 = pneg %p368
        $region110: #{tpu_custom_call.1} parent=107 // pred_check_branch
          %1981 = sbr.rel (%p1979) target = $region112
        $region111: #{tpu_custom_call.1} parent=107 // pred_region
          %s1982 = sand.u32 %s353, 1
          %s1983 = scalar_lea.sflag [#allocation8], %s1982
          %s1984 = sand.u32 %s353, 1
          %s1985 = smul.addr %s1984, 8
          %s1986 = scalar_lea.vmem [#allocation15], %s1985
          %1987 = dma.done %s1983, 128
        $region112: #{tpu_custom_call.1} parent=107 // pred_fallthru
          _
      $region108: #{tpu_custom_call.1} parent=5 // pred_fallthru
        _
    $region6: #{tpu_custom_call.1} parent=1 // loop_footer
      %s30 = sadd.s32 1, %s26
    $region7: #{tpu_custom_call.1} parent=1 // loop_footer_branch
      %25 = sbr.rel target = $region3
    $region8: #{tpu_custom_call.1} parent=1 // loop_exit
      _
    %1988 = vsyncpa [#allocation7], 1
    %s1989 = scalar_lea.sflag [#allocation7], 1
    %1990 = vsyncpa %s1989, 1
    %1991 = vsyncpa [#allocation10], 1
    %1992 = vsyncpa [#allocation13], 1
    %1993 = vsyncpa [#allocation8], 1
    %s1994 = scalar_lea.sflag [#allocation8], 1
    %1995 = vsyncpa %s1994, 1

</llo_original>
